<compile_context>
chip_gen: v7x
topology: tpu7x:2x2x1
jax: 0.10.0
libtpu: 0.0.40
codegen_flags: <defaults>
</compile_context>

<pallas_src>
import functools

import jax
import jax.numpy as jnp
from jax.experimental import pallas as pl
from jax.experimental.pallas import tpu as pltpu

NEG_SLOPE = 0.2      # LeakyReLU(negative_slope=0.2)
BN_EPS = 1e-5        # nn.BatchNorm1d default eps
_LANES = 128
_SUBLANES = 8
_NEG_BIG = -1e30     # softmax mask for the value lane / padded logit lanes


def _round_up(x, m):
    return (x + m - 1) // m * m


def _pack_params(pieces):
    """Stack 2-D f32 arrays into one (R, 128) slab; rows sublane-aligned, lanes zero-padded."""
    blocks, layout, off = [], {}, 0
    for name, a in pieces:
        r, c = a.shape
        assert c <= _LANES, f"{name}: {c} lanes > {_LANES}"
        rpad = _round_up(r, _SUBLANES)
        blk = jnp.zeros((rpad, _LANES), jnp.float32).at[:r, :c].set(a.astype(jnp.float32))
        blocks.append(blk)
        layout[name] = (off, rpad)
        off += rpad
    return jnp.concatenate(blocks, axis=0), layout


def _def_a2c_kernel(state_ref, p_ref, out_ref, *, layout, a_dim):
    """4 MXU dots + lane-masked softmax; everything lane-dense (., 128)."""

    def piece(name):
        off, rows = layout[name]
        return p_ref[pl.ds(off, rows), :]          # full 128-lane, sublane-aligned load

    def mm(a, b):
        return jnp.dot(a, b, preferred_element_type=jnp.float32,
                       precision=jax.lax.Precision.HIGHEST)

    def lrelu(z):
        return jnp.maximum(z, NEG_SLOPE * z)       # == LeakyReLU(0.2) for slope in (0,1)

    bias = piece("bias")                           # (8,128): rows 0..3 = b1,b2,hb1,hb2
    b1 = bias[0:1, :]
    b2 = bias[1:2, :]
    hb1 = bias[2:3, :]
    hb2 = bias[3:4, :]

    x = state_ref[...]                             # (8,128)  state, zero lane/row padded
    # GCN layer 1: project+aggregate+BN folded into one kron weight; payoff term in b1.
    h1 = lrelu(mm(x, piece("g1")) + b1)            # (8,128) = (8, T*32)
    # Dropout(0.25): identity in eval mode.
    # GCN layer 2: lanes [0:16T) are exactly the torch .view(-1, 16T) flatten layout.
    h2 = lrelu(mm(h1, piece("g2")) + b2)           # (8,128), lanes >= 16T are 0
    # Fused actor1 || value1 head.
    hidden = lrelu(mm(h2, piece("h1w")) + hb1)     # (8,128) = (8, 24T+32)
    # Fused actor2 || value2 head (block-diag weight); mask bias pre-folded into hb2.
    comb = mm(hidden, piece("h2w")) + hb2          # (8,128): [logits(A) | value | 0...]

    lane = jax.lax.broadcasted_iota(jnp.int32, comb.shape, dimension=1)
    logits = jnp.where(lane < a_dim, comb, _NEG_BIG)   # drop value + pad lanes from softmax
    m = jnp.max(logits, axis=-1, keepdims=True)
    e = jnp.exp(logits - m)                            # masked lanes underflow to 0
    s = jnp.sum(e, axis=-1, keepdims=True)
    inv = pl.reciprocal(s, approx=True)
    inv = inv * (2.0 - s * inv)                        # one Newton step -> ~f32 1/s
    # Single lane-dense store: actor probs in lanes [0:A], critic value in lane A.
    out_ref[...] = jnp.where(lane == a_dim, comb, e * inv)


def make_def_a2c_gcn_full(params, mask_bias, batch_size):
    """Fold BN / payoff / kron / head fusions once; return forward(state) -> (act, val)."""
    hp = jax.lax.Precision.HIGHEST
    payoff = params["payoff"].astype(jnp.float32)            # (T, Fp)
    adj = params["norm_adj"].astype(jnp.float32)              # (T, T)
    T, Fp = payoff.shape
    F = params["gc1_w"].shape[0]
    Fs = F - Fp
    A = params["a2_w"].shape[1]
    na = params["a1_w"].shape[1]                               # 24*T
    C1 = params["gc1_w"].shape[1]                              # 32
    C2 = params["gc2_w"].shape[1]                              # 16
    B = batch_size
    Bp = _round_up(max(B, 1), _SUBLANES)                       # sublane-full batch rows

    # BatchNorm1d(num_target) eval-mode fold (per-target scale/shift).
    bn_scale = params["bn_g"] / jnp.sqrt(params["bn_v"] + BN_EPS)    # (T,1)
    bn_shift = params["bn_b"] - params["bn_m"] * bn_scale            # (T,1)
    adj_bn = bn_scale * adj                                          # (T,T), exact fold

    # Split gc1 weight; fold the batch-invariant payoff projection into the bias.
    gc1_w_state = params["gc1_w"][:Fs]                               # (Fs,C1)
    gc1_w_payoff = params["gc1_w"][Fs:]                              # (Fp,C1)
    payoff_term = jnp.dot(adj_bn, jnp.dot(payoff, gc1_w_payoff, precision=hp),
                          precision=hp)                              # (T,C1)
    bias1 = payoff_term + bn_scale * params["gc1_b"] + bn_shift      # (T,C1)
    bias2 = bn_scale * params["gc2_b"] + bn_shift                    # (T,C2)

    # Project + aggregate (+BN scale) folded per layer:
    #   kron(I_T, W) @ kron(adj_bn^T, I) == kron(adj_bn^T, W)
    g1 = jnp.kron(adj_bn.T, gc1_w_state)                             # (T*Fs, T*C1)
    g2 = jnp.kron(adj_bn.T, params["gc2_w"])                         # (T*C1, T*C2)

    # Fused actor||value heads.
    head1_w = jnp.concatenate([params["a1_w"], params["v1_w"]], axis=1)   # (16T, 24T+32)
    head1_b = jnp.concatenate([params["a1_b"], params["v1_b"]], axis=1)   # (1, 24T+32)
    H1 = head1_w.shape[1]
    head2_w = jnp.zeros((H1, A + 1), jnp.float32)
    head2_w = head2_w.at[:na, :A].set(params["a2_w"])
    head2_w = head2_w.at[na:, A:].set(params["v2_w"])
    head2_b = jnp.concatenate([params["a2_b"] + mask_bias, params["v2_b"]], axis=1)

    def rowpad(a, rows=_LANES):    # zero-pad rows so every MXU RHS is a full-height tile
        return jnp.zeros((rows, a.shape[1]), jnp.float32).at[:a.shape[0]].set(a)

    def lanepad(a):
        return jnp.zeros((a.shape[0], _LANES), jnp.float32).at[:, :a.shape[1]].set(a)

    biases = jnp.concatenate([
        lanepad(bias1.reshape(1, T * C1)),
        lanepad(bias2.reshape(1, T * C2)),
        lanepad(head1_b),
        lanepad(head2_b),
    ], axis=0)                                                        # (4,128)

    slab, layout = _pack_params([
        ("g1", rowpad(g1)),         # (128,128)
        ("g2", rowpad(g2)),         # (128,128) after lane pad
        ("h1w", rowpad(head1_w)),   # (128,128)
        ("h2w", rowpad(head2_w)),   # (128,128) after lane pad
        ("bias", biases),           # (8,128)
    ])

    kernel = functools.partial(_def_a2c_kernel, layout=layout, a_dim=A)
    vmem = pl.BlockSpec(memory_space=pltpu.MemorySpace.VMEM)
    call = pl.pallas_call(
        kernel,
        out_shape=jax.ShapeDtypeStruct((Bp, _LANES), jnp.float32),
        in_specs=[vmem, vmem],
        out_specs=vmem,
    )

    @jax.jit
    def forward(state):
        x = state.reshape(B, T * Fs).astype(jnp.float32)
        x = jnp.zeros((Bp, _LANES), jnp.float32).at[:B, :T * Fs].set(x)   # lane-dense input
        out = call(x, slab)                                               # (Bp, 128)
        return out[:B, :A], out[:B, A:A + 1]

    return forward


def reference(state, p, mask_bias):
    """Pure-JAX reference of the PyTorch forward (eval mode), full f32 precision."""
    hp = jax.lax.Precision.HIGHEST
    B = state.shape[0]
    lrelu = lambda z: jnp.where(z > 0, z, NEG_SLOPE * z)
    payoff_b = jnp.broadcast_to(p["payoff"][None], (B,) + p["payoff"].shape)
    x = jnp.concatenate([state, payoff_b], axis=-1)

    def gcn(h, w, bias):
        s = jnp.einsum("btf,fo->bto", h, w, precision=hp)
        return jnp.einsum("tu,buo->bto", p["norm_adj"], s, precision=hp) + bias[None]

    scale = p["bn_g"] / jnp.sqrt(p["bn_v"] + BN_EPS)     # (T, 1)
    shift = p["bn_b"] - p["bn_m"] * scale
    h1 = lrelu(gcn(x, p["gc1_w"], p["gc1_b"]) * scale[None] + shift[None])
    h2 = lrelu(gcn(h1, p["gc2_w"], p["gc2_b"]) * scale[None] + shift[None])
    flat = h2.reshape(B, -1)
    a1 = lrelu(jnp.dot(flat, p["a1_w"], precision=hp) + p["a1_b"])
    logits = jnp.dot(a1, p["a2_w"], precision=hp) + p["a2_b"] + mask_bias
    act = jax.nn.softmax(logits, axis=-1)
    v1 = lrelu(jnp.dot(flat, p["v1_w"], precision=hp) + p["v1_b"])
    val = jnp.dot(v1, p["v2_w"], precision=hp) + p["v2_b"]
    return act, val


if __name__ == "__main__":
    # Shapes consistent with the module:
    #   num_target T = 4, num_res = T // 2 = 2, action space A = T ** num_res = 16
    #   state features Fs = 2, payoff columns Fp = 4  ->  num_feature = 6
    B, T, Fs, Fp = 2, 4, 2, 4
    F = Fs + Fp
    R = T // 2
    A = T ** R

    key = jax.random.PRNGKey(0)
    ks = jax.random.split(key, 20)

    state = jax.random.normal(ks[0], (B, T, Fs), dtype=jnp.float32)
    payoff = jax.random.normal(ks[1], (T, Fp), dtype=jnp.float32)

    # Deterministic symmetric-normalized adjacency (D^-1/2 (A + I) D^-1/2)
    raw = (jax.random.uniform(ks[2], (T, T)) > 0.5).astype(jnp.float32)
    raw = jnp.minimum(jnp.maximum(raw, raw.T) + jnp.eye(T, dtype=jnp.float32), 1.0)
    dinv = 1.0 / jnp.sqrt(raw.sum(axis=1))
    norm_adj = raw * dinv[:, None] * dinv[None, :]

    # Validity mask -> additive bias (plain JAX glue, folded into the kernel head bias)
    validity_mask = (jax.random.uniform(ks[3], (1, A)) > 0.3).astype(jnp.int32)
    mask_bias = jnp.where(validity_mask == 0, -9999.0, 0.0).astype(jnp.float32)

    def w(k, shape, scale=0.1):
        return (scale * jax.random.normal(k, shape)).astype(jnp.float32)

    params = {
        "payoff": payoff,
        "norm_adj": norm_adj,
        # gc1: num_feature -> 32 ; gc2: 32 -> 16  (weights stored (in, out))
        "gc1_w": w(ks[4], (F, 32)),  "gc1_b": w(ks[5], (1, 32)),
        "gc2_w": w(ks[6], (32, 16)), "gc2_b": w(ks[7], (1, 16)),
        # BatchNorm1d(num_target) running stats / affine params, shape (T, 1)
        "bn_g": (1.0 + 0.1 * jax.random.normal(ks[8], (T, 1))).astype(jnp.float32),
        "bn_b": w(ks[9], (T, 1)),
        "bn_m": w(ks[10], (T, 1)),
        "bn_v": (1.0 + 0.2 * jax.random.uniform(ks[11], (T, 1))).astype(jnp.float32),
        # ln_actor1: 16T -> 24T ; ln_actor2: 24T -> T**num_res
        "a1_w": w(ks[12], (16 * T, 24 * T)), "a1_b": w(ks[13], (1, 24 * T)),
        "a2_w": w(ks[14], (24 * T, A)),      "a2_b": w(ks[15], (1, A)),
        # ln_value1: 16T -> 32 ; ln_value2: 32 -> 1
        "v1_w": w(ks[16], (16 * T, 32)), "v1_b": w(ks[17], (1, 32)),
        "v2_w": w(ks[18], (32, 1)),      "v2_b": w(ks[19], (1, 1)),
    }

    forward = make_def_a2c_gcn_full(params, mask_bias, B)
    act, val = jax.block_until_ready(forward(state))

    act_ref, val_ref = reference(state, params, mask_bias)
    assert act.shape == (B, A) and val.shape == (B, 1)
    assert jnp.allclose(act, act_ref, atol=1e-4, rtol=1e-3), "actor head mismatch"
    assert jnp.allclose(val, val_ref, atol=1e-4, rtol=1e-3), "value head mismatch"
    # TODO(synk): training-mode BatchNorm (batch statistics) and Dropout RNG are not
    # reproduced; eval-mode semantics (running stats, identity dropout) are implemented.

    print("KERNEL_OK")
</pallas_src>

<mosaic_0001>
module attributes {stable_mosaic.version = 11 : i64} {
  func.func @_def_a2c_kernel(%arg0: memref<8x128xf32, #tpu.memory_space<vmem>>, %arg1: memref<520x128xf32, #tpu.memory_space<vmem>>, %arg2: memref<8x128xf32, #tpu.memory_space<vmem>>) attributes {dimension_semantics = [], scalar_prefetch = 0 : i64, scratch_operands = 0 : i64, tpu.core_type = #tpu.core_type<tc>} {
    %c512 = arith.constant 512 : index
    %c0 = arith.constant 0 : index
    %0 = vector.load %arg1[%c512, %c0] : memref<520x128xf32, #tpu.memory_space<vmem>>, vector<8x128xf32>
    %1 = vector.extract_strided_slice %0 {offsets = [0, 0], sizes = [1, 128], strides = [1, 1]} : vector<8x128xf32> to vector<1x128xf32>
    %2 = vector.extract_strided_slice %0 {offsets = [1, 0], sizes = [1, 128], strides = [1, 1]} : vector<8x128xf32> to vector<1x128xf32>
    %3 = vector.extract_strided_slice %0 {offsets = [2, 0], sizes = [1, 128], strides = [1, 1]} : vector<8x128xf32> to vector<1x128xf32>
    %4 = vector.extract_strided_slice %0 {offsets = [3, 0], sizes = [1, 128], strides = [1, 1]} : vector<8x128xf32> to vector<1x128xf32>
    %c0_0 = arith.constant 0 : index
    %c0_1 = arith.constant 0 : index
    %5 = vector.load %arg0[%c0_0, %c0_1] : memref<8x128xf32, #tpu.memory_space<vmem>>, vector<8x128xf32>
    %c0_2 = arith.constant 0 : index
    %c0_3 = arith.constant 0 : index
    %6 = vector.load %arg1[%c0_2, %c0_3] : memref<520x128xf32, #tpu.memory_space<vmem>>, vector<128x128xf32>
    %cst = arith.constant dense<0.000000e+00> : vector<8x128xf32>
    %7 = tpu.matmul %5, %6, %cst {dimension_numbers = #tpu.dot_dimension_numbers<[1], [0], [0], [1], [0, 0, 1, 1], [], []>, precision = #tpu.contract_precision<fp32>} : vector<8x128xf32>, vector<128x128xf32>, vector<8x128xf32> -> vector<8x128xf32>
    %8 = vector.broadcast %1 : vector<1x128xf32> to vector<8x128xf32>
    %9 = arith.addf %7, %8 : vector<8x128xf32>
    %cst_4 = arith.constant 2.000000e-01 : f32
    %10 = vector.broadcast %cst_4 : f32 to vector<8x128xf32>
    %11 = arith.mulf %10, %9 : vector<8x128xf32>
    %12 = arith.maximumf %9, %11 : vector<8x128xf32>
    %c128 = arith.constant 128 : index
    %c0_5 = arith.constant 0 : index
    %13 = vector.load %arg1[%c128, %c0_5] : memref<520x128xf32, #tpu.memory_space<vmem>>, vector<128x128xf32>
    %cst_6 = arith.constant dense<0.000000e+00> : vector<8x128xf32>
    %14 = tpu.matmul %12, %13, %cst_6 {dimension_numbers = #tpu.dot_dimension_numbers<[1], [0], [0], [1], [0, 0, 1, 1], [], []>, precision = #tpu.contract_precision<fp32>} : vector<8x128xf32>, vector<128x128xf32>, vector<8x128xf32> -> vector<8x128xf32>
    %15 = vector.broadcast %2 : vector<1x128xf32> to vector<8x128xf32>
    %16 = arith.addf %14, %15 : vector<8x128xf32>
    %cst_7 = arith.constant 2.000000e-01 : f32
    %17 = vector.broadcast %cst_7 : f32 to vector<8x128xf32>
    %18 = arith.mulf %17, %16 : vector<8x128xf32>
    %19 = arith.maximumf %16, %18 : vector<8x128xf32>
    %c256 = arith.constant 256 : index
    %c0_8 = arith.constant 0 : index
    %20 = vector.load %arg1[%c256, %c0_8] : memref<520x128xf32, #tpu.memory_space<vmem>>, vector<128x128xf32>
    %cst_9 = arith.constant dense<0.000000e+00> : vector<8x128xf32>
    %21 = tpu.matmul %19, %20, %cst_9 {dimension_numbers = #tpu.dot_dimension_numbers<[1], [0], [0], [1], [0, 0, 1, 1], [], []>, precision = #tpu.contract_precision<fp32>} : vector<8x128xf32>, vector<128x128xf32>, vector<8x128xf32> -> vector<8x128xf32>
    %22 = vector.broadcast %3 : vector<1x128xf32> to vector<8x128xf32>
    %23 = arith.addf %21, %22 : vector<8x128xf32>
    %cst_10 = arith.constant 2.000000e-01 : f32
    %24 = vector.broadcast %cst_10 : f32 to vector<8x128xf32>
    %25 = arith.mulf %24, %23 : vector<8x128xf32>
    %26 = arith.maximumf %23, %25 : vector<8x128xf32>
    %c384 = arith.constant 384 : index
    %c0_11 = arith.constant 0 : index
    %27 = vector.load %arg1[%c384, %c0_11] : memref<520x128xf32, #tpu.memory_space<vmem>>, vector<128x128xf32>
    %cst_12 = arith.constant dense<0.000000e+00> : vector<8x128xf32>
    %28 = tpu.matmul %26, %27, %cst_12 {dimension_numbers = #tpu.dot_dimension_numbers<[1], [0], [0], [1], [0, 0, 1, 1], [], []>, precision = #tpu.contract_precision<fp32>} : vector<8x128xf32>, vector<128x128xf32>, vector<8x128xf32> -> vector<8x128xf32>
    %29 = vector.broadcast %4 : vector<1x128xf32> to vector<8x128xf32>
    %30 = arith.addf %28, %29 : vector<8x128xf32>
    %31 = tpu.iota {dimensions = array<i32: 1>} : vector<8x128xi32>
    %c16_i32 = arith.constant 16 : i32
    %32 = vector.broadcast %c16_i32 : i32 to vector<8x128xi32>
    %33 = arith.cmpi slt, %31, %32 : vector<8x128xi32>
    %cst_13 = arith.constant -1.000000e+30 : f32
    %34 = vector.broadcast %cst_13 : f32 to vector<8x128xf32>
    %35 = arith.select %33, %30, %34 : vector<8x128xi1>, vector<8x128xf32>
    %cst_14 = arith.constant dense<0xFF800000> : vector<8xf32>
    %36 = vector.multi_reduction <maximumf>, %35, %cst_14 [1] : vector<8x128xf32> to vector<8xf32>
    %37 = vector.shape_cast %36 : vector<8xf32> to vector<8x1xf32>
    %38 = vector.broadcast %37 : vector<8x1xf32> to vector<8x128xf32>
    %39 = arith.subf %35, %38 : vector<8x128xf32>
    %40 = math.exp %39 : vector<8x128xf32>
    %cst_15 = arith.constant dense<0.000000e+00> : vector<8xf32>
    %41 = vector.multi_reduction <add>, %40, %cst_15 [1] : vector<8x128xf32> to vector<8xf32>
    %42 = vector.shape_cast %41 : vector<8xf32> to vector<8x1xf32>
    %43 = tpu.reciprocal %42 {approx = true} : vector<8x1xf32> -> vector<8x1xf32>
    %44 = arith.mulf %42, %43 : vector<8x1xf32>
    %cst_16 = arith.constant 2.000000e+00 : f32
    %45 = vector.broadcast %cst_16 : f32 to vector<8x1xf32>
    %46 = arith.subf %45, %44 : vector<8x1xf32>
    %47 = arith.mulf %43, %46 : vector<8x1xf32>
    %c16_i32_17 = arith.constant 16 : i32
    %48 = vector.broadcast %c16_i32_17 : i32 to vector<8x128xi32>
    %49 = arith.cmpi eq, %31, %48 : vector<8x128xi32>
    %50 = vector.broadcast %47 : vector<8x1xf32> to vector<8x128xf32>
    %51 = arith.mulf %40, %50 : vector<8x128xf32>
    %52 = arith.select %49, %30, %51 : vector<8x128xi1>, vector<8x128xf32>
    %c0_18 = arith.constant 0 : index
    %c0_19 = arith.constant 0 : index
    %53 = vector.load %arg2[%c0_18, %c0_19] : memref<8x128xf32, #tpu.memory_space<vmem>>, vector<8x128xf32>
    tpu.vector_store %arg2[%c0_18, %c0_19], %52 {strides = array<i32>} : memref<8x128xf32, #tpu.memory_space<vmem>>, vector<8x128xf32>,
    return
  }
}

</mosaic_0001>

<llo_original>
// kernel: forward.1
$region0: #{forward.1}
  #allocation0 [shape = 'u32[]', space=smem, size = 0x4, offset = 0x4, fixed_abs, tag = 'smem constant byte address 0x4 - core index']
  #allocation1 [shape = 'u32[144,128]{1,0:T(1,128)}', space=vmem, size = 0x12000, scoped, tag = 'internal scratch']
  %s0 = inlined_call_operand.vmem [shape: f32[8,128], index: 0, kind: input, shape index: {}]
  %s1 = inlined_call_operand.hbm [shape: f32[520,128], index: 1, kind: input, shape index: {}]
  %s2 = inlined_call_operand.vmem [shape: f32[8,128], index: 2, kind: output, shape index: {}]
  %s3 = sld [smem:[#allocation0]]
  $region22: #{forward.1} parent=0
    _
  %s5 = ssub.s32 1, %s3
  %s6 = scalar_select 0, %s5, %s3
  $region1: #{forward.1} parent=0
    #allocation2 [shape = 'u8[266240]{0}', space=vmem, size = 0x41000, scoped, tag = 'input window, operand 1, single buffered']
    #allocation3 [shape = 's32[1]{0}', space=sflag, size = 0x4, scoped, tag = 'scoped memory for forward.1']
    %7 = vsyncpa [#allocation3], 0
    // Predicated region
    $region2: #{forward.1} parent=1 // pred_check
      _
    $region3: #{forward.1} parent=1 // pred_check_branch
      %9 = sbr.rel (0) target = $region5
    $region4: #{forward.1} parent=1 // pred_region
      _
    $region5: #{forward.1} parent=1 // pred_fallthru
      _
    // Predicated region
    $region6: #{forward.1} parent=1 // pred_check
      _
    $region7: #{forward.1} parent=1 // pred_check_branch
      %11 = sbr.rel (0) target = $region9
    $region8: #{forward.1} parent=1 // pred_region
      %s13 = ssub.s32 8320, 8320
      %14 = vsyncadd [#allocation3], %s13
      %s15 = sshll.u32 [#allocation2], 4
      %s16 = int_to_ptr.vmem [resolvable:$true] %s15
      %21 = dma.hbm_to_vmem [thread:$0]  %s1, 8320, %s16, [#allocation3], 128, 128, 8
    $region9: #{forward.1} parent=1 // pred_fallthru
      _
    // Predicated region
    $region10: #{forward.1} parent=1 // pred_check
      _
    $region11: #{forward.1} parent=1 // pred_check_branch
      %23 = sbr.rel (0) target = $region13
    $region12: #{forward.1} parent=1 // pred_region
      %24 = dma.done [#allocation3], 8320
    $region13: #{forward.1} parent=1 // pred_fallthru
      _
    %v25 = vld [vmem:[#allocation2 + $0x200] sm:$0xff]
    %v26 = vld [vmem:[%s0] sm:$0xff]
    %v27 = vld [vmem:[#allocation2] sm:$0xff]
    %v28 = vld [vmem:[#allocation2 + $0x8] sm:$0xff]
    %v29 = vld [vmem:[#allocation2 + $0x10] sm:$0xff]
    %v30 = vld [vmem:[#allocation2 + $0x18] sm:$0xff]
    %v31 = vld [vmem:[#allocation2 + $0x20] sm:$0xff]
    %v32 = vld [vmem:[#allocation2 + $0x28] sm:$0xff]
    %v33 = vld [vmem:[#allocation2 + $0x30] sm:$0xff]
    %v34 = vld [vmem:[#allocation2 + $0x38] sm:$0xff]
    %v35 = vld [vmem:[#allocation2 + $0x40] sm:$0xff]
    %v36 = vld [vmem:[#allocation2 + $0x48] sm:$0xff]
    %v37 = vld [vmem:[#allocation2 + $0x50] sm:$0xff]
    %v38 = vld [vmem:[#allocation2 + $0x58] sm:$0xff]
    %v39 = vld [vmem:[#allocation2 + $0x60] sm:$0xff]
    %v40 = vld [vmem:[#allocation2 + $0x68] sm:$0xff]
    %v41 = vld [vmem:[#allocation2 + $0x70] sm:$0xff]
    %v42 = vld [vmem:[#allocation2 + $0x78] sm:$0xff]
    %v43 = vlaneseq
    %v44 = vshrl.u32 %v43, 7
    %v45 = vsub.s32 0, %v44
    %v46 = vrot.slane %v25, %v45
    %47 = vmatprep.subr.mxu0 0.0
    %v48 = vand.u32 %v27, 4294901760
    %49 = vmatpush1.msra.mxu0 %v48
    %50 = vmatprep.subr.mxu0 0.0
    %v51 = vand.u32 %v28, 4294901760
    %52 = vmatpush1.msra.mxu0 %v51
    %53 = vmatprep.subr.mxu0 0.0
    %v54 = vand.u32 %v29, 4294901760
    %55 = vmatpush1.msra.mxu0 %v54
    %56 = vmatprep.subr.mxu0 0.0
    %v57 = vand.u32 %v30, 4294901760
    %58 = vmatpush1.msra.mxu0 %v57
    %59 = vmatprep.subr.mxu0 0.0
    %v60 = vand.u32 %v31, 4294901760
    %61 = vmatpush1.msra.mxu0 %v60
    %62 = vmatprep.subr.mxu0 0.0
    %v63 = vand.u32 %v32, 4294901760
    %64 = vmatpush1.msra.mxu0 %v63
    %65 = vmatprep.subr.mxu0 0.0
    %v66 = vand.u32 %v33, 4294901760
    %67 = vmatpush1.msra.mxu0 %v66
    %68 = vmatprep.subr.mxu0 0.0
    %v69 = vand.u32 %v34, 4294901760
    %70 = vmatpush1.msra.mxu0 %v69
    %71 = vmatprep.subr.mxu0 0.0
    %v72 = vand.u32 %v35, 4294901760
    %73 = vmatpush1.msra.mxu0 %v72
    %74 = vmatprep.subr.mxu0 0.0
    %v75 = vand.u32 %v36, 4294901760
    %76 = vmatpush1.msra.mxu0 %v75
    %77 = vmatprep.subr.mxu0 0.0
    %v78 = vand.u32 %v37, 4294901760
    %79 = vmatpush1.msra.mxu0 %v78
    %80 = vmatprep.subr.mxu0 0.0
    %v81 = vand.u32 %v38, 4294901760
    %82 = vmatpush1.msra.mxu0 %v81
    %83 = vmatprep.subr.mxu0 0.0
    %v84 = vand.u32 %v39, 4294901760
    %85 = vmatpush1.msra.mxu0 %v84
    %86 = vmatprep.subr.mxu0 0.0
    %v87 = vand.u32 %v40, 4294901760
    %88 = vmatpush1.msra.mxu0 %v87
    %89 = vmatprep.subr.mxu0 0.0
    %v90 = vand.u32 %v41, 4294901760
    %91 = vmatpush1.msra.mxu0 %v90
    %92 = vmatprep.subr.mxu0 0.0
    %v93 = vand.u32 %v42, 4294901760
    %94 = vmatpush1.msra.mxu0 %v93
    %95 = vmatprep.subr.mxu0 0.0
    %96 = vmatpush1.msra.mxu0 0.0
    %97 = vmatprep.subr.mxu0 0.0
    %98 = vmatpush1.msra.mxu0 0.0
    %99 = vmatprep.subr.mxu0 0.0
    %100 = vmatpush1.msra.mxu0 0.0
    %101 = vmatprep.subr.mxu0 0.0
    %102 = vmatpush1.msra.mxu0 0.0
    %103 = vmatprep.subr.mxu0 0.0
    %104 = vmatpush1.msra.mxu0 0.0
    %105 = vmatprep.subr.mxu0 0.0
    %106 = vmatpush1.msra.mxu0 0.0
    %107 = vmatprep.subr.mxu0 0.0
    %108 = vmatpush1.msra.mxu0 0.0
    %109 = vmatprep.subr.mxu0 0.0
    %110 = vmatpush1.msra.mxu0 0.0
    %111 = vmatprep.subr.mxu0 0.0
    %112 = vmatpush1.msra.mxu0 0.0
    %113 = vmatprep.subr.mxu0 0.0
    %114 = vmatpush1.msra.mxu0 0.0
    %115 = vmatprep.subr.mxu0 0.0
    %116 = vmatpush1.msra.mxu0 0.0
    %117 = vmatprep.subr.mxu0 0.0
    %118 = vmatpush1.msra.mxu0 0.0
    %119 = vmatprep.subr.mxu0 0.0
    %120 = vmatpush1.msra.mxu0 0.0
    %121 = vmatprep.subr.mxu0 0.0
    %122 = vmatpush1.msra.mxu0 0.0
    %123 = vmatprep.subr.mxu0 0.0
    %124 = vmatpush1.msra.mxu0 0.0
    %125 = vmatprep.subr.mxu0 0.0
    %126 = vmatpush1.msra.mxu0 0.0
    %127 = vmatprep.mubr.f32.mxu0 0.0
    %v128 = vand.u32 %v26, 4294901760
    %v129 = vsub.f32 %v26, %v128
    %v130 = vand.u32 %v129, 4294901760
    %v131 = vsub.f32 %v129, %v130
    %v132 = vand.u32 %v131, 4294901760
    %133 = vmatmul.mubr.f32.gmra.mrb[0].mxu0 %v132
    %v134 = vpop.f32.mrb[0].mxu0
    %v135 = vadd.f32 %v46, %v134
    %v136 = vpop.f32.mrb[0].mxu0
    %137 = vdwg.mxu0
    %138 = vmatprep.subr.mxu0 0.0
    %v139 = vand.u32 %v27, 4294901760
    %v140 = vsub.f32 %v27, %v139
    %v141 = vand.u32 %v140, 4294901760
    %v142 = vsub.f32 %v140, %v141
    %v143 = vand.u32 %v142, 4294901760
    %144 = vmatpush1.msra.mxu0 %v143
    %145 = vmatprep.subr.mxu0 0.0
    %v146 = vand.u32 %v28, 4294901760
    %v147 = vsub.f32 %v28, %v146
    %v148 = vand.u32 %v147, 4294901760
    %v149 = vsub.f32 %v147, %v148
    %v150 = vand.u32 %v149, 4294901760
    %151 = vmatpush1.msra.mxu0 %v150
    %152 = vmatprep.subr.mxu0 0.0
    %v153 = vand.u32 %v29, 4294901760
    %v154 = vsub.f32 %v29, %v153
    %v155 = vand.u32 %v154, 4294901760
    %v156 = vsub.f32 %v154, %v155
    %v157 = vand.u32 %v156, 4294901760
    %158 = vmatpush1.msra.mxu0 %v157
    %159 = vmatprep.subr.mxu0 0.0
    %v160 = vand.u32 %v30, 4294901760
    %v161 = vsub.f32 %v30, %v160
    %v162 = vand.u32 %v161, 4294901760
    %v163 = vsub.f32 %v161, %v162
    %v164 = vand.u32 %v163, 4294901760
    %165 = vmatpush1.msra.mxu0 %v164
    %166 = vmatprep.subr.mxu0 0.0
    %v167 = vand.u32 %v31, 4294901760
    %v168 = vsub.f32 %v31, %v167
    %v169 = vand.u32 %v168, 4294901760
    %v170 = vsub.f32 %v168, %v169
    %v171 = vand.u32 %v170, 4294901760
    %172 = vmatpush1.msra.mxu0 %v171
    %173 = vmatprep.subr.mxu0 0.0
    %v174 = vand.u32 %v32, 4294901760
    %v175 = vsub.f32 %v32, %v174
    %v176 = vand.u32 %v175, 4294901760
    %v177 = vsub.f32 %v175, %v176
    %v178 = vand.u32 %v177, 4294901760
    %179 = vmatpush1.msra.mxu0 %v178
    %180 = vmatprep.subr.mxu0 0.0
    %v181 = vand.u32 %v33, 4294901760
    %v182 = vsub.f32 %v33, %v181
    %v183 = vand.u32 %v182, 4294901760
    %v184 = vsub.f32 %v182, %v183
    %v185 = vand.u32 %v184, 4294901760
    %186 = vmatpush1.msra.mxu0 %v185
    %187 = vmatprep.subr.mxu0 0.0
    %v188 = vand.u32 %v34, 4294901760
    %v189 = vsub.f32 %v34, %v188
    %v190 = vand.u32 %v189, 4294901760
    %v191 = vsub.f32 %v189, %v190
    %v192 = vand.u32 %v191, 4294901760
    %193 = vmatpush1.msra.mxu0 %v192
    %194 = vmatprep.subr.mxu0 0.0
    %v195 = vand.u32 %v35, 4294901760
    %v196 = vsub.f32 %v35, %v195
    %v197 = vand.u32 %v196, 4294901760
    %v198 = vsub.f32 %v196, %v197
    %v199 = vand.u32 %v198, 4294901760
    %200 = vmatpush1.msra.mxu0 %v199
    %201 = vmatprep.subr.mxu0 0.0
    %v202 = vand.u32 %v36, 4294901760
    %v203 = vsub.f32 %v36, %v202
    %v204 = vand.u32 %v203, 4294901760
    %v205 = vsub.f32 %v203, %v204
    %v206 = vand.u32 %v205, 4294901760
    %207 = vmatpush1.msra.mxu0 %v206
    %208 = vmatprep.subr.mxu0 0.0
    %v209 = vand.u32 %v37, 4294901760
    %v210 = vsub.f32 %v37, %v209
    %v211 = vand.u32 %v210, 4294901760
    %v212 = vsub.f32 %v210, %v211
    %v213 = vand.u32 %v212, 4294901760
    %214 = vmatpush1.msra.mxu0 %v213
    %215 = vmatprep.subr.mxu0 0.0
    %v216 = vand.u32 %v38, 4294901760
    %v217 = vsub.f32 %v38, %v216
    %v218 = vand.u32 %v217, 4294901760
    %v219 = vsub.f32 %v217, %v218
    %v220 = vand.u32 %v219, 4294901760
    %221 = vmatpush1.msra.mxu0 %v220
    %222 = vmatprep.subr.mxu0 0.0
    %v223 = vand.u32 %v39, 4294901760
    %v224 = vsub.f32 %v39, %v223
    %v225 = vand.u32 %v224, 4294901760
    %v226 = vsub.f32 %v224, %v225
    %v227 = vand.u32 %v226, 4294901760
    %228 = vmatpush1.msra.mxu0 %v227
    %229 = vmatprep.subr.mxu0 0.0
    %v230 = vand.u32 %v40, 4294901760
    %v231 = vsub.f32 %v40, %v230
    %v232 = vand.u32 %v231, 4294901760
    %v233 = vsub.f32 %v231, %v232
    %v234 = vand.u32 %v233, 4294901760
    %235 = vmatpush1.msra.mxu0 %v234
    %236 = vmatprep.subr.mxu0 0.0
    %v237 = vand.u32 %v41, 4294901760
    %v238 = vsub.f32 %v41, %v237
    %v239 = vand.u32 %v238, 4294901760
    %v240 = vsub.f32 %v238, %v239
    %v241 = vand.u32 %v240, 4294901760
    %242 = vmatpush1.msra.mxu0 %v241
    %243 = vmatprep.subr.mxu0 0.0
    %v244 = vand.u32 %v42, 4294901760
    %v245 = vsub.f32 %v42, %v244
    %v246 = vand.u32 %v245, 4294901760
    %v247 = vsub.f32 %v245, %v246
    %v248 = vand.u32 %v247, 4294901760
    %249 = vmatpush1.msra.mxu0 %v248
    %250 = vmatprep.subr.mxu0 0.0
    %251 = vmatpush1.msra.mxu0 0.0
    %252 = vmatprep.subr.mxu0 0.0
    %253 = vmatpush1.msra.mxu0 0.0
    %254 = vmatprep.subr.mxu0 0.0
    %255 = vmatpush1.msra.mxu0 0.0
    %256 = vmatprep.subr.mxu0 0.0
    %257 = vmatpush1.msra.mxu0 0.0
    %258 = vmatprep.subr.mxu0 0.0
    %259 = vmatpush1.msra.mxu0 0.0
    %260 = vmatprep.subr.mxu0 0.0
    %261 = vmatpush1.msra.mxu0 0.0
    %262 = vmatprep.subr.mxu0 0.0
    %263 = vmatpush1.msra.mxu0 0.0
    %264 = vmatprep.subr.mxu0 0.0
    %265 = vmatpush1.msra.mxu0 0.0
    %266 = vmatprep.subr.mxu0 0.0
    %267 = vmatpush1.msra.mxu0 0.0
    %268 = vmatprep.subr.mxu0 0.0
    %269 = vmatpush1.msra.mxu0 0.0
    %270 = vmatprep.subr.mxu0 0.0
    %271 = vmatpush1.msra.mxu0 0.0
    %272 = vmatprep.subr.mxu0 0.0
    %273 = vmatpush1.msra.mxu0 0.0
    %274 = vmatprep.subr.mxu0 0.0
    %275 = vmatpush1.msra.mxu0 0.0
    %276 = vmatprep.subr.mxu0 0.0
    %277 = vmatpush1.msra.mxu0 0.0
    %278 = vmatprep.subr.mxu0 0.0
    %279 = vmatpush1.msra.mxu0 0.0
    %280 = vmatprep.subr.mxu0 0.0
    %281 = vmatpush1.msra.mxu0 0.0
    %282 = vmatprep.mubr.f32.mxu0 0.0
    %v283 = vand.u32 %v26, 4294901760
    %284 = vmatmul.mubr.f32.gmra.mrb[0].mxu0 %v283
    %v285 = vpop.f32.mrb[0].mxu0
    %v286 = vadd.f32 %v135, %v285
    %v287 = vpop.f32.mrb[0].mxu0
    %288 = vdwg.mxu0
    %289 = vmatprep.subr.mxu0 0.0
    %v290 = vand.u32 %v27, 4294901760
    %v291 = vsub.f32 %v27, %v290
    %292 = vmatpush1.msra.mxu0 %v291
    %293 = vmatprep.subr.mxu0 0.0
    %v294 = vand.u32 %v28, 4294901760
    %v295 = vsub.f32 %v28, %v294
    %296 = vmatpush1.msra.mxu0 %v295
    %297 = vmatprep.subr.mxu0 0.0
    %v298 = vand.u32 %v29, 4294901760
    %v299 = vsub.f32 %v29, %v298
    %300 = vmatpush1.msra.mxu0 %v299
    %301 = vmatprep.subr.mxu0 0.0
    %v302 = vand.u32 %v30, 4294901760
    %v303 = vsub.f32 %v30, %v302
    %304 = vmatpush1.msra.mxu0 %v303
    %305 = vmatprep.subr.mxu0 0.0
    %v306 = vand.u32 %v31, 4294901760
    %v307 = vsub.f32 %v31, %v306
    %308 = vmatpush1.msra.mxu0 %v307
    %309 = vmatprep.subr.mxu0 0.0
    %v310 = vand.u32 %v32, 4294901760
    %v311 = vsub.f32 %v32, %v310
    %312 = vmatpush1.msra.mxu0 %v311
    %313 = vmatprep.subr.mxu0 0.0
    %v314 = vand.u32 %v33, 4294901760
    %v315 = vsub.f32 %v33, %v314
    %316 = vmatpush1.msra.mxu0 %v315
    %317 = vmatprep.subr.mxu0 0.0
    %v318 = vand.u32 %v34, 4294901760
    %v319 = vsub.f32 %v34, %v318
    %320 = vmatpush1.msra.mxu0 %v319
    %321 = vmatprep.subr.mxu0 0.0
    %v322 = vand.u32 %v35, 4294901760
    %v323 = vsub.f32 %v35, %v322
    %324 = vmatpush1.msra.mxu0 %v323
    %325 = vmatprep.subr.mxu0 0.0
    %v326 = vand.u32 %v36, 4294901760
    %v327 = vsub.f32 %v36, %v326
    %328 = vmatpush1.msra.mxu0 %v327
    %329 = vmatprep.subr.mxu0 0.0
    %v330 = vand.u32 %v37, 4294901760
    %v331 = vsub.f32 %v37, %v330
    %332 = vmatpush1.msra.mxu0 %v331
    %333 = vmatprep.subr.mxu0 0.0
    %v334 = vand.u32 %v38, 4294901760
    %v335 = vsub.f32 %v38, %v334
    %336 = vmatpush1.msra.mxu0 %v335
    %337 = vmatprep.subr.mxu0 0.0
    %v338 = vand.u32 %v39, 4294901760
    %v339 = vsub.f32 %v39, %v338
    %340 = vmatpush1.msra.mxu0 %v339
    %341 = vmatprep.subr.mxu0 0.0
    %v342 = vand.u32 %v40, 4294901760
    %v343 = vsub.f32 %v40, %v342
    %344 = vmatpush1.msra.mxu0 %v343
    %345 = vmatprep.subr.mxu0 0.0
    %v346 = vand.u32 %v41, 4294901760
    %v347 = vsub.f32 %v41, %v346
    %348 = vmatpush1.msra.mxu0 %v347
    %349 = vmatprep.subr.mxu0 0.0
    %v350 = vand.u32 %v42, 4294901760
    %v351 = vsub.f32 %v42, %v350
    %352 = vmatpush1.msra.mxu0 %v351
    %353 = vmatprep.subr.mxu0 0.0
    %354 = vmatpush1.msra.mxu0 0.0
    %355 = vmatprep.subr.mxu0 0.0
    %356 = vmatpush1.msra.mxu0 0.0
    %357 = vmatprep.subr.mxu0 0.0
    %358 = vmatpush1.msra.mxu0 0.0
    %359 = vmatprep.subr.mxu0 0.0
    %360 = vmatpush1.msra.mxu0 0.0
    %361 = vmatprep.subr.mxu0 0.0
    %362 = vmatpush1.msra.mxu0 0.0
    %363 = vmatprep.subr.mxu0 0.0
    %364 = vmatpush1.msra.mxu0 0.0
    %365 = vmatprep.subr.mxu0 0.0
    %366 = vmatpush1.msra.mxu0 0.0
    %367 = vmatprep.subr.mxu0 0.0
    %368 = vmatpush1.msra.mxu0 0.0
    %369 = vmatprep.subr.mxu0 0.0
    %370 = vmatpush1.msra.mxu0 0.0
    %371 = vmatprep.subr.mxu0 0.0
    %372 = vmatpush1.msra.mxu0 0.0
    %373 = vmatprep.subr.mxu0 0.0
    %374 = vmatpush1.msra.mxu0 0.0
    %375 = vmatprep.subr.mxu0 0.0
    %376 = vmatpush1.msra.mxu0 0.0
    %377 = vmatprep.subr.mxu0 0.0
    %378 = vmatpush1.msra.mxu0 0.0
    %379 = vmatprep.subr.mxu0 0.0
    %380 = vmatpush1.msra.mxu0 0.0
    %381 = vmatprep.subr.mxu0 0.0
    %382 = vmatpush1.msra.mxu0 0.0
    %383 = vmatprep.subr.mxu0 0.0
    %384 = vmatpush1.msra.mxu0 0.0
    %385 = vmatprep.mubr.f32.mxu0 0.0
    %v386 = vand.u32 %v26, 4294901760
    %v387 = vsub.f32 %v26, %v386
    %388 = vmatmul.mubr.f32.gmra.mrb[0].mxu0 %v387
    %v389 = vpop.f32.mrb[0].mxu0
    %v390 = vadd.f32 %v286, %v389
    %v391 = vpop.f32.mrb[0].mxu0
    %392 = vdwg.mxu0
    %393 = vmatprep.subr.mxu0 0.0
    %v394 = vand.u32 %v27, 4294901760
    %395 = vmatpush1.msra.mxu0 %v394
    %396 = vmatprep.subr.mxu0 0.0
    %v397 = vand.u32 %v28, 4294901760
    %398 = vmatpush1.msra.mxu0 %v397
    %399 = vmatprep.subr.mxu0 0.0
    %v400 = vand.u32 %v29, 4294901760
    %401 = vmatpush1.msra.mxu0 %v400
    %402 = vmatprep.subr.mxu0 0.0
    %v403 = vand.u32 %v30, 4294901760
    %404 = vmatpush1.msra.mxu0 %v403
    %405 = vmatprep.subr.mxu0 0.0
    %v406 = vand.u32 %v31, 4294901760
    %407 = vmatpush1.msra.mxu0 %v406
    %408 = vmatprep.subr.mxu0 0.0
    %v409 = vand.u32 %v32, 4294901760
    %410 = vmatpush1.msra.mxu0 %v409
    %411 = vmatprep.subr.mxu0 0.0
    %v412 = vand.u32 %v33, 4294901760
    %413 = vmatpush1.msra.mxu0 %v412
    %414 = vmatprep.subr.mxu0 0.0
    %v415 = vand.u32 %v34, 4294901760
    %416 = vmatpush1.msra.mxu0 %v415
    %417 = vmatprep.subr.mxu0 0.0
    %v418 = vand.u32 %v35, 4294901760
    %419 = vmatpush1.msra.mxu0 %v418
    %420 = vmatprep.subr.mxu0 0.0
    %v421 = vand.u32 %v36, 4294901760
    %422 = vmatpush1.msra.mxu0 %v421
    %423 = vmatprep.subr.mxu0 0.0
    %v424 = vand.u32 %v37, 4294901760
    %425 = vmatpush1.msra.mxu0 %v424
    %426 = vmatprep.subr.mxu0 0.0
    %v427 = vand.u32 %v38, 4294901760
    %428 = vmatpush1.msra.mxu0 %v427
    %429 = vmatprep.subr.mxu0 0.0
    %v430 = vand.u32 %v39, 4294901760
    %431 = vmatpush1.msra.mxu0 %v430
    %432 = vmatprep.subr.mxu0 0.0
    %v433 = vand.u32 %v40, 4294901760
    %434 = vmatpush1.msra.mxu0 %v433
    %435 = vmatprep.subr.mxu0 0.0
    %v436 = vand.u32 %v41, 4294901760
    %437 = vmatpush1.msra.mxu0 %v436
    %438 = vmatprep.subr.mxu0 0.0
    %v439 = vand.u32 %v42, 4294901760
    %440 = vmatpush1.msra.mxu0 %v439
    %441 = vmatprep.subr.mxu0 0.0
    %442 = vmatpush1.msra.mxu0 0.0
    %443 = vmatprep.subr.mxu0 0.0
    %444 = vmatpush1.msra.mxu0 0.0
    %445 = vmatprep.subr.mxu0 0.0
    %446 = vmatpush1.msra.mxu0 0.0
    %447 = vmatprep.subr.mxu0 0.0
    %448 = vmatpush1.msra.mxu0 0.0
    %449 = vmatprep.subr.mxu0 0.0
    %450 = vmatpush1.msra.mxu0 0.0
    %451 = vmatprep.subr.mxu0 0.0
    %452 = vmatpush1.msra.mxu0 0.0
    %453 = vmatprep.subr.mxu0 0.0
    %454 = vmatpush1.msra.mxu0 0.0
    %455 = vmatprep.subr.mxu0 0.0
    %456 = vmatpush1.msra.mxu0 0.0
    %457 = vmatprep.subr.mxu0 0.0
    %458 = vmatpush1.msra.mxu0 0.0
    %459 = vmatprep.subr.mxu0 0.0
    %460 = vmatpush1.msra.mxu0 0.0
    %461 = vmatprep.subr.mxu0 0.0
    %462 = vmatpush1.msra.mxu0 0.0
    %463 = vmatprep.subr.mxu0 0.0
    %464 = vmatpush1.msra.mxu0 0.0
    %465 = vmatprep.subr.mxu0 0.0
    %466 = vmatpush1.msra.mxu0 0.0
    %467 = vmatprep.subr.mxu0 0.0
    %468 = vmatpush1.msra.mxu0 0.0
    %469 = vmatprep.subr.mxu0 0.0
    %470 = vmatpush1.msra.mxu0 0.0
    %471 = vmatprep.subr.mxu0 0.0
    %472 = vmatpush1.msra.mxu0 0.0
    %473 = vmatprep.mubr.f32.mxu0 0.0
    %v474 = vand.u32 %v26, 4294901760
    %v475 = vsub.f32 %v26, %v474
    %v476 = vand.u32 %v475, 4294901760
    %477 = vmatmul.mubr.f32.gmra.mrb[0].mxu0 %v476
    %v478 = vpop.f32.mrb[0].mxu0
    %v479 = vadd.f32 %v390, %v478
    %v480 = vpop.f32.mrb[0].mxu0
    %481 = vdwg.mxu0
    %482 = vmatprep.subr.mxu0 0.0
    %v483 = vand.u32 %v27, 4294901760
    %v484 = vsub.f32 %v27, %v483
    %v485 = vand.u32 %v484, 4294901760
    %486 = vmatpush1.msra.mxu0 %v485
    %487 = vmatprep.subr.mxu0 0.0
    %v488 = vand.u32 %v28, 4294901760
    %v489 = vsub.f32 %v28, %v488
    %v490 = vand.u32 %v489, 4294901760
    %491 = vmatpush1.msra.mxu0 %v490
    %492 = vmatprep.subr.mxu0 0.0
    %v493 = vand.u32 %v29, 4294901760
    %v494 = vsub.f32 %v29, %v493
    %v495 = vand.u32 %v494, 4294901760
    %496 = vmatpush1.msra.mxu0 %v495
    %497 = vmatprep.subr.mxu0 0.0
    %v498 = vand.u32 %v30, 4294901760
    %v499 = vsub.f32 %v30, %v498
    %v500 = vand.u32 %v499, 4294901760
    %501 = vmatpush1.msra.mxu0 %v500
    %502 = vmatprep.subr.mxu0 0.0
    %v503 = vand.u32 %v31, 4294901760
    %v504 = vsub.f32 %v31, %v503
    %v505 = vand.u32 %v504, 4294901760
    %506 = vmatpush1.msra.mxu0 %v505
    %507 = vmatprep.subr.mxu0 0.0
    %v508 = vand.u32 %v32, 4294901760
    %v509 = vsub.f32 %v32, %v508
    %v510 = vand.u32 %v509, 4294901760
    %511 = vmatpush1.msra.mxu0 %v510
    %512 = vmatprep.subr.mxu0 0.0
    %v513 = vand.u32 %v33, 4294901760
    %v514 = vsub.f32 %v33, %v513
    %v515 = vand.u32 %v514, 4294901760
    %516 = vmatpush1.msra.mxu0 %v515
    %517 = vmatprep.subr.mxu0 0.0
    %v518 = vand.u32 %v34, 4294901760
    %v519 = vsub.f32 %v34, %v518
    %v520 = vand.u32 %v519, 4294901760
    %521 = vmatpush1.msra.mxu0 %v520
    %522 = vmatprep.subr.mxu0 0.0
    %v523 = vand.u32 %v35, 4294901760
    %v524 = vsub.f32 %v35, %v523
    %v525 = vand.u32 %v524, 4294901760
    %526 = vmatpush1.msra.mxu0 %v525
    %527 = vmatprep.subr.mxu0 0.0
    %v528 = vand.u32 %v36, 4294901760
    %v529 = vsub.f32 %v36, %v528
    %v530 = vand.u32 %v529, 4294901760
    %531 = vmatpush1.msra.mxu0 %v530
    %532 = vmatprep.subr.mxu0 0.0
    %v533 = vand.u32 %v37, 4294901760
    %v534 = vsub.f32 %v37, %v533
    %v535 = vand.u32 %v534, 4294901760
    %536 = vmatpush1.msra.mxu0 %v535
    %537 = vmatprep.subr.mxu0 0.0
    %v538 = vand.u32 %v38, 4294901760
    %v539 = vsub.f32 %v38, %v538
    %v540 = vand.u32 %v539, 4294901760
    %541 = vmatpush1.msra.mxu0 %v540
    %542 = vmatprep.subr.mxu0 0.0
    %v543 = vand.u32 %v39, 4294901760
    %v544 = vsub.f32 %v39, %v543
    %v545 = vand.u32 %v544, 4294901760
    %546 = vmatpush1.msra.mxu0 %v545
    %547 = vmatprep.subr.mxu0 0.0
    %v548 = vand.u32 %v40, 4294901760
    %v549 = vsub.f32 %v40, %v548
    %v550 = vand.u32 %v549, 4294901760
    %551 = vmatpush1.msra.mxu0 %v550
    %552 = vmatprep.subr.mxu0 0.0
    %v553 = vand.u32 %v41, 4294901760
    %v554 = vsub.f32 %v41, %v553
    %v555 = vand.u32 %v554, 4294901760
    %556 = vmatpush1.msra.mxu0 %v555
    %557 = vmatprep.subr.mxu0 0.0
    %v558 = vand.u32 %v42, 4294901760
    %v559 = vsub.f32 %v42, %v558
    %v560 = vand.u32 %v559, 4294901760
    %561 = vmatpush1.msra.mxu0 %v560
    %562 = vmatprep.subr.mxu0 0.0
    %563 = vmatpush1.msra.mxu0 0.0
    %564 = vmatprep.subr.mxu0 0.0
    %565 = vmatpush1.msra.mxu0 0.0
    %566 = vmatprep.subr.mxu0 0.0
    %567 = vmatpush1.msra.mxu0 0.0
    %568 = vmatprep.subr.mxu0 0.0
    %569 = vmatpush1.msra.mxu0 0.0
    %570 = vmatprep.subr.mxu0 0.0
    %571 = vmatpush1.msra.mxu0 0.0
    %572 = vmatprep.subr.mxu0 0.0
    %573 = vmatpush1.msra.mxu0 0.0
    %574 = vmatprep.subr.mxu0 0.0
    %575 = vmatpush1.msra.mxu0 0.0
    %576 = vmatprep.subr.mxu0 0.0
    %577 = vmatpush1.msra.mxu0 0.0
    %578 = vmatprep.subr.mxu0 0.0
    %579 = vmatpush1.msra.mxu0 0.0
    %580 = vmatprep.subr.mxu0 0.0
    %581 = vmatpush1.msra.mxu0 0.0
    %582 = vmatprep.subr.mxu0 0.0
    %583 = vmatpush1.msra.mxu0 0.0
    %584 = vmatprep.subr.mxu0 0.0
    %585 = vmatpush1.msra.mxu0 0.0
    %586 = vmatprep.subr.mxu0 0.0
    %587 = vmatpush1.msra.mxu0 0.0
    %588 = vmatprep.subr.mxu0 0.0
    %589 = vmatpush1.msra.mxu0 0.0
    %590 = vmatprep.subr.mxu0 0.0
    %591 = vmatpush1.msra.mxu0 0.0
    %592 = vmatprep.subr.mxu0 0.0
    %593 = vmatpush1.msra.mxu0 0.0
    %594 = vmatprep.mubr.f32.mxu0 0.0
    %v595 = vand.u32 %v26, 4294901760
    %596 = vmatmul.mubr.f32.gmra.mrb[0].mxu0 %v595
    %v597 = vpop.f32.mrb[0].mxu0
    %v598 = vadd.f32 %v479, %v597
    %v599 = vpop.f32.mrb[0].mxu0
    %600 = vdwg.mxu0
    %601 = vmatprep.subr.mxu0 0.0
    %v602 = vand.u32 %v27, 4294901760
    %603 = vmatpush1.msra.mxu0 %v602
    %604 = vmatprep.subr.mxu0 0.0
    %v605 = vand.u32 %v28, 4294901760
    %606 = vmatpush1.msra.mxu0 %v605
    %607 = vmatprep.subr.mxu0 0.0
    %v608 = vand.u32 %v29, 4294901760
    %609 = vmatpush1.msra.mxu0 %v608
    %610 = vmatprep.subr.mxu0 0.0
    %v611 = vand.u32 %v30, 4294901760
    %612 = vmatpush1.msra.mxu0 %v611
    %613 = vmatprep.subr.mxu0 0.0
    %v614 = vand.u32 %v31, 4294901760
    %615 = vmatpush1.msra.mxu0 %v614
    %616 = vmatprep.subr.mxu0 0.0
    %v617 = vand.u32 %v32, 4294901760
    %618 = vmatpush1.msra.mxu0 %v617
    %619 = vmatprep.subr.mxu0 0.0
    %v620 = vand.u32 %v33, 4294901760
    %621 = vmatpush1.msra.mxu0 %v620
    %622 = vmatprep.subr.mxu0 0.0
    %v623 = vand.u32 %v34, 4294901760
    %624 = vmatpush1.msra.mxu0 %v623
    %625 = vmatprep.subr.mxu0 0.0
    %v626 = vand.u32 %v35, 4294901760
    %627 = vmatpush1.msra.mxu0 %v626
    %628 = vmatprep.subr.mxu0 0.0
    %v629 = vand.u32 %v36, 4294901760
    %630 = vmatpush1.msra.mxu0 %v629
    %631 = vmatprep.subr.mxu0 0.0
    %v632 = vand.u32 %v37, 4294901760
    %633 = vmatpush1.msra.mxu0 %v632
    %634 = vmatprep.subr.mxu0 0.0
    %v635 = vand.u32 %v38, 4294901760
    %636 = vmatpush1.msra.mxu0 %v635
    %637 = vmatprep.subr.mxu0 0.0
    %v638 = vand.u32 %v39, 4294901760
    %639 = vmatpush1.msra.mxu0 %v638
    %640 = vmatprep.subr.mxu0 0.0
    %v641 = vand.u32 %v40, 4294901760
    %642 = vmatpush1.msra.mxu0 %v641
    %643 = vmatprep.subr.mxu0 0.0
    %v644 = vand.u32 %v41, 4294901760
    %645 = vmatpush1.msra.mxu0 %v644
    %646 = vmatprep.subr.mxu0 0.0
    %v647 = vand.u32 %v42, 4294901760
    %648 = vmatpush1.msra.mxu0 %v647
    %649 = vmatprep.subr.mxu0 0.0
    %650 = vmatpush1.msra.mxu0 0.0
    %651 = vmatprep.subr.mxu0 0.0
    %652 = vmatpush1.msra.mxu0 0.0
    %653 = vmatprep.subr.mxu0 0.0
    %654 = vmatpush1.msra.mxu0 0.0
    %655 = vmatprep.subr.mxu0 0.0
    %656 = vmatpush1.msra.mxu0 0.0
    %657 = vmatprep.subr.mxu0 0.0
    %658 = vmatpush1.msra.mxu0 0.0
    %659 = vmatprep.subr.mxu0 0.0
    %660 = vmatpush1.msra.mxu0 0.0
    %661 = vmatprep.subr.mxu0 0.0
    %662 = vmatpush1.msra.mxu0 0.0
    %663 = vmatprep.subr.mxu0 0.0
    %664 = vmatpush1.msra.mxu0 0.0
    %665 = vmatprep.subr.mxu0 0.0
    %666 = vmatpush1.msra.mxu0 0.0
    %667 = vmatprep.subr.mxu0 0.0
    %668 = vmatpush1.msra.mxu0 0.0
    %669 = vmatprep.subr.mxu0 0.0
    %670 = vmatpush1.msra.mxu0 0.0
    %671 = vmatprep.subr.mxu0 0.0
    %672 = vmatpush1.msra.mxu0 0.0
    %673 = vmatprep.subr.mxu0 0.0
    %674 = vmatpush1.msra.mxu0 0.0
    %675 = vmatprep.subr.mxu0 0.0
    %676 = vmatpush1.msra.mxu0 0.0
    %677 = vmatprep.subr.mxu0 0.0
    %678 = vmatpush1.msra.mxu0 0.0
    %679 = vmatprep.subr.mxu0 0.0
    %680 = vmatpush1.msra.mxu0 0.0
    %681 = vmatprep.mubr.f32.mxu0 0.0
    %v682 = vand.u32 %v26, 4294901760
    %683 = vmatmul.mubr.f32.gmra.mrb[0].mxu0 %v682
    %v684 = vpop.f32.mrb[0].mxu0
    %v685 = vadd.f32 %v598, %v684
    %v686 = vpop.f32.mrb[0].mxu0
    %687 = vdwg.mxu0
    %v688 = vmul.f32 %v685, 0.2
    %v689 = vmax.f32 %v685, %v688
    %v690 = vld [vmem:[#allocation2 + $0x80] sm:$0xff]
    %v691 = vld [vmem:[#allocation2 + $0x88] sm:$0xff]
    %v692 = vld [vmem:[#allocation2 + $0x90] sm:$0xff]
    %v693 = vld [vmem:[#allocation2 + $0x98] sm:$0xff]
    %v694 = vld [vmem:[#allocation2 + $0xa0] sm:$0xff]
    %v695 = vld [vmem:[#allocation2 + $0xa8] sm:$0xff]
    %v696 = vld [vmem:[#allocation2 + $0xb0] sm:$0xff]
    %v697 = vld [vmem:[#allocation2 + $0xb8] sm:$0xff]
    %v698 = vld [vmem:[#allocation2 + $0xc0] sm:$0xff]
    %v699 = vld [vmem:[#allocation2 + $0xc8] sm:$0xff]
    %v700 = vld [vmem:[#allocation2 + $0xd0] sm:$0xff]
    %v701 = vld [vmem:[#allocation2 + $0xd8] sm:$0xff]
    %v702 = vld [vmem:[#allocation2 + $0xe0] sm:$0xff]
    %v703 = vld [vmem:[#allocation2 + $0xe8] sm:$0xff]
    %v704 = vld [vmem:[#allocation2 + $0xf0] sm:$0xff]
    %v705 = vld [vmem:[#allocation2 + $0xf8] sm:$0xff]
    %v706 = vlaneseq
    %v707 = vshrl.u32 %v706, 7
    %v708 = vsub.s32 1, %v707
    %v709 = vrot.slane %v25, %v708
    %710 = vmatprep.subr.mxu0 0.0
    %v711 = vand.u32 %v690, 4294901760
    %712 = vmatpush1.msra.mxu0 %v711
    %713 = vmatprep.subr.mxu0 0.0
    %v714 = vand.u32 %v691, 4294901760
    %715 = vmatpush1.msra.mxu0 %v714
    %716 = vmatprep.subr.mxu0 0.0
    %v717 = vand.u32 %v692, 4294901760
    %718 = vmatpush1.msra.mxu0 %v717
    %719 = vmatprep.subr.mxu0 0.0
    %v720 = vand.u32 %v693, 4294901760
    %721 = vmatpush1.msra.mxu0 %v720
    %722 = vmatprep.subr.mxu0 0.0
    %v723 = vand.u32 %v694, 4294901760
    %724 = vmatpush1.msra.mxu0 %v723
    %725 = vmatprep.subr.mxu0 0.0
    %v726 = vand.u32 %v695, 4294901760
    %727 = vmatpush1.msra.mxu0 %v726
    %728 = vmatprep.subr.mxu0 0.0
    %v729 = vand.u32 %v696, 4294901760
    %730 = vmatpush1.msra.mxu0 %v729
    %731 = vmatprep.subr.mxu0 0.0
    %v732 = vand.u32 %v697, 4294901760
    %733 = vmatpush1.msra.mxu0 %v732
    %734 = vmatprep.subr.mxu0 0.0
    %v735 = vand.u32 %v698, 4294901760
    %736 = vmatpush1.msra.mxu0 %v735
    %737 = vmatprep.subr.mxu0 0.0
    %v738 = vand.u32 %v699, 4294901760
    %739 = vmatpush1.msra.mxu0 %v738
    %740 = vmatprep.subr.mxu0 0.0
    %v741 = vand.u32 %v700, 4294901760
    %742 = vmatpush1.msra.mxu0 %v741
    %743 = vmatprep.subr.mxu0 0.0
    %v744 = vand.u32 %v701, 4294901760
    %745 = vmatpush1.msra.mxu0 %v744
    %746 = vmatprep.subr.mxu0 0.0
    %v747 = vand.u32 %v702, 4294901760
    %748 = vmatpush1.msra.mxu0 %v747
    %749 = vmatprep.subr.mxu0 0.0
    %v750 = vand.u32 %v703, 4294901760
    %751 = vmatpush1.msra.mxu0 %v750
    %752 = vmatprep.subr.mxu0 0.0
    %v753 = vand.u32 %v704, 4294901760
    %754 = vmatpush1.msra.mxu0 %v753
    %755 = vmatprep.subr.mxu0 0.0
    %v756 = vand.u32 %v705, 4294901760
    %757 = vmatpush1.msra.mxu0 %v756
    %758 = vmatprep.subr.mxu0 0.0
    %759 = vmatpush1.msra.mxu0 0.0
    %760 = vmatprep.subr.mxu0 0.0
    %761 = vmatpush1.msra.mxu0 0.0
    %762 = vmatprep.subr.mxu0 0.0
    %763 = vmatpush1.msra.mxu0 0.0
    %764 = vmatprep.subr.mxu0 0.0
    %765 = vmatpush1.msra.mxu0 0.0
    %766 = vmatprep.subr.mxu0 0.0
    %767 = vmatpush1.msra.mxu0 0.0
    %768 = vmatprep.subr.mxu0 0.0
    %769 = vmatpush1.msra.mxu0 0.0
    %770 = vmatprep.subr.mxu0 0.0
    %771 = vmatpush1.msra.mxu0 0.0
    %772 = vmatprep.subr.mxu0 0.0
    %773 = vmatpush1.msra.mxu0 0.0
    %774 = vmatprep.subr.mxu0 0.0
    %775 = vmatpush1.msra.mxu0 0.0
    %776 = vmatprep.subr.mxu0 0.0
    %777 = vmatpush1.msra.mxu0 0.0
    %778 = vmatprep.subr.mxu0 0.0
    %779 = vmatpush1.msra.mxu0 0.0
    %780 = vmatprep.subr.mxu0 0.0
    %781 = vmatpush1.msra.mxu0 0.0
    %782 = vmatprep.subr.mxu0 0.0
    %783 = vmatpush1.msra.mxu0 0.0
    %784 = vmatprep.subr.mxu0 0.0
    %785 = vmatpush1.msra.mxu0 0.0
    %786 = vmatprep.subr.mxu0 0.0
    %787 = vmatpush1.msra.mxu0 0.0
    %788 = vmatprep.subr.mxu0 0.0
    %789 = vmatpush1.msra.mxu0 0.0
    %790 = vmatprep.mubr.f32.mxu0 0.0
    %v791 = vand.u32 %v689, 4294901760
    %v792 = vsub.f32 %v689, %v791
    %v793 = vand.u32 %v792, 4294901760
    %v794 = vsub.f32 %v792, %v793
    %v795 = vand.u32 %v794, 4294901760
    %796 = vmatmul.mubr.f32.gmra.mrb[0].mxu0 %v795
    %v797 = vpop.f32.mrb[0].mxu0
    %v798 = vadd.f32 %v709, %v797
    %v799 = vpop.f32.mrb[0].mxu0
    %800 = vdwg.mxu0
    %801 = vmatprep.subr.mxu0 0.0
    %v802 = vand.u32 %v690, 4294901760
    %v803 = vsub.f32 %v690, %v802
    %v804 = vand.u32 %v803, 4294901760
    %v805 = vsub.f32 %v803, %v804
    %v806 = vand.u32 %v805, 4294901760
    %807 = vmatpush1.msra.mxu0 %v806
    %808 = vmatprep.subr.mxu0 0.0
    %v809 = vand.u32 %v691, 4294901760
    %v810 = vsub.f32 %v691, %v809
    %v811 = vand.u32 %v810, 4294901760
    %v812 = vsub.f32 %v810, %v811
    %v813 = vand.u32 %v812, 4294901760
    %814 = vmatpush1.msra.mxu0 %v813
    %815 = vmatprep.subr.mxu0 0.0
    %v816 = vand.u32 %v692, 4294901760
    %v817 = vsub.f32 %v692, %v816
    %v818 = vand.u32 %v817, 4294901760
    %v819 = vsub.f32 %v817, %v818
    %v820 = vand.u32 %v819, 4294901760
    %821 = vmatpush1.msra.mxu0 %v820
    %822 = vmatprep.subr.mxu0 0.0
    %v823 = vand.u32 %v693, 4294901760
    %v824 = vsub.f32 %v693, %v823
    %v825 = vand.u32 %v824, 4294901760
    %v826 = vsub.f32 %v824, %v825
    %v827 = vand.u32 %v826, 4294901760
    %828 = vmatpush1.msra.mxu0 %v827
    %829 = vmatprep.subr.mxu0 0.0
    %v830 = vand.u32 %v694, 4294901760
    %v831 = vsub.f32 %v694, %v830
    %v832 = vand.u32 %v831, 4294901760
    %v833 = vsub.f32 %v831, %v832
    %v834 = vand.u32 %v833, 4294901760
    %835 = vmatpush1.msra.mxu0 %v834
    %836 = vmatprep.subr.mxu0 0.0
    %v837 = vand.u32 %v695, 4294901760
    %v838 = vsub.f32 %v695, %v837
    %v839 = vand.u32 %v838, 4294901760
    %v840 = vsub.f32 %v838, %v839
    %v841 = vand.u32 %v840, 4294901760
    %842 = vmatpush1.msra.mxu0 %v841
    %843 = vmatprep.subr.mxu0 0.0
    %v844 = vand.u32 %v696, 4294901760
    %v845 = vsub.f32 %v696, %v844
    %v846 = vand.u32 %v845, 4294901760
    %v847 = vsub.f32 %v845, %v846
    %v848 = vand.u32 %v847, 4294901760
    %849 = vmatpush1.msra.mxu0 %v848
    %850 = vmatprep.subr.mxu0 0.0
    %v851 = vand.u32 %v697, 4294901760
    %v852 = vsub.f32 %v697, %v851
    %v853 = vand.u32 %v852, 4294901760
    %v854 = vsub.f32 %v852, %v853
    %v855 = vand.u32 %v854, 4294901760
    %856 = vmatpush1.msra.mxu0 %v855
    %857 = vmatprep.subr.mxu0 0.0
    %v858 = vand.u32 %v698, 4294901760
    %v859 = vsub.f32 %v698, %v858
    %v860 = vand.u32 %v859, 4294901760
    %v861 = vsub.f32 %v859, %v860
    %v862 = vand.u32 %v861, 4294901760
    %863 = vmatpush1.msra.mxu0 %v862
    %864 = vmatprep.subr.mxu0 0.0
    %v865 = vand.u32 %v699, 4294901760
    %v866 = vsub.f32 %v699, %v865
    %v867 = vand.u32 %v866, 4294901760
    %v868 = vsub.f32 %v866, %v867
    %v869 = vand.u32 %v868, 4294901760
    %870 = vmatpush1.msra.mxu0 %v869
    %871 = vmatprep.subr.mxu0 0.0
    %v872 = vand.u32 %v700, 4294901760
    %v873 = vsub.f32 %v700, %v872
    %v874 = vand.u32 %v873, 4294901760
    %v875 = vsub.f32 %v873, %v874
    %v876 = vand.u32 %v875, 4294901760
    %877 = vmatpush1.msra.mxu0 %v876
    %878 = vmatprep.subr.mxu0 0.0
    %v879 = vand.u32 %v701, 4294901760
    %v880 = vsub.f32 %v701, %v879
    %v881 = vand.u32 %v880, 4294901760
    %v882 = vsub.f32 %v880, %v881
    %v883 = vand.u32 %v882, 4294901760
    %884 = vmatpush1.msra.mxu0 %v883
    %885 = vmatprep.subr.mxu0 0.0
    %v886 = vand.u32 %v702, 4294901760
    %v887 = vsub.f32 %v702, %v886
    %v888 = vand.u32 %v887, 4294901760
    %v889 = vsub.f32 %v887, %v888
    %v890 = vand.u32 %v889, 4294901760
    %891 = vmatpush1.msra.mxu0 %v890
    %892 = vmatprep.subr.mxu0 0.0
    %v893 = vand.u32 %v703, 4294901760
    %v894 = vsub.f32 %v703, %v893
    %v895 = vand.u32 %v894, 4294901760
    %v896 = vsub.f32 %v894, %v895
    %v897 = vand.u32 %v896, 4294901760
    %898 = vmatpush1.msra.mxu0 %v897
    %899 = vmatprep.subr.mxu0 0.0
    %v900 = vand.u32 %v704, 4294901760
    %v901 = vsub.f32 %v704, %v900
    %v902 = vand.u32 %v901, 4294901760
    %v903 = vsub.f32 %v901, %v902
    %v904 = vand.u32 %v903, 4294901760
    %905 = vmatpush1.msra.mxu0 %v904
    %906 = vmatprep.subr.mxu0 0.0
    %v907 = vand.u32 %v705, 4294901760
    %v908 = vsub.f32 %v705, %v907
    %v909 = vand.u32 %v908, 4294901760
    %v910 = vsub.f32 %v908, %v909
    %v911 = vand.u32 %v910, 4294901760
    %912 = vmatpush1.msra.mxu0 %v911
    %913 = vmatprep.subr.mxu0 0.0
    %914 = vmatpush1.msra.mxu0 0.0
    %915 = vmatprep.subr.mxu0 0.0
    %916 = vmatpush1.msra.mxu0 0.0
    %917 = vmatprep.subr.mxu0 0.0
    %918 = vmatpush1.msra.mxu0 0.0
    %919 = vmatprep.subr.mxu0 0.0
    %920 = vmatpush1.msra.mxu0 0.0
    %921 = vmatprep.subr.mxu0 0.0
    %922 = vmatpush1.msra.mxu0 0.0
    %923 = vmatprep.subr.mxu0 0.0
    %924 = vmatpush1.msra.mxu0 0.0
    %925 = vmatprep.subr.mxu0 0.0
    %926 = vmatpush1.msra.mxu0 0.0
    %927 = vmatprep.subr.mxu0 0.0
    %928 = vmatpush1.msra.mxu0 0.0
    %929 = vmatprep.subr.mxu0 0.0
    %930 = vmatpush1.msra.mxu0 0.0
    %931 = vmatprep.subr.mxu0 0.0
    %932 = vmatpush1.msra.mxu0 0.0
    %933 = vmatprep.subr.mxu0 0.0
    %934 = vmatpush1.msra.mxu0 0.0
    %935 = vmatprep.subr.mxu0 0.0
    %936 = vmatpush1.msra.mxu0 0.0
    %937 = vmatprep.subr.mxu0 0.0
    %938 = vmatpush1.msra.mxu0 0.0
    %939 = vmatprep.subr.mxu0 0.0
    %940 = vmatpush1.msra.mxu0 0.0
    %941 = vmatprep.subr.mxu0 0.0
    %942 = vmatpush1.msra.mxu0 0.0
    %943 = vmatprep.subr.mxu0 0.0
    %944 = vmatpush1.msra.mxu0 0.0
    %945 = vmatprep.mubr.f32.mxu0 0.0
    %v946 = vand.u32 %v689, 4294901760
    %947 = vmatmul.mubr.f32.gmra.mrb[0].mxu0 %v946
    %v948 = vpop.f32.mrb[0].mxu0
    %v949 = vadd.f32 %v798, %v948
    %v950 = vpop.f32.mrb[0].mxu0
    %951 = vdwg.mxu0
    %952 = vmatprep.subr.mxu0 0.0
    %v953 = vand.u32 %v690, 4294901760
    %v954 = vsub.f32 %v690, %v953
    %955 = vmatpush1.msra.mxu0 %v954
    %956 = vmatprep.subr.mxu0 0.0
    %v957 = vand.u32 %v691, 4294901760
    %v958 = vsub.f32 %v691, %v957
    %959 = vmatpush1.msra.mxu0 %v958
    %960 = vmatprep.subr.mxu0 0.0
    %v961 = vand.u32 %v692, 4294901760
    %v962 = vsub.f32 %v692, %v961
    %963 = vmatpush1.msra.mxu0 %v962
    %964 = vmatprep.subr.mxu0 0.0
    %v965 = vand.u32 %v693, 4294901760
    %v966 = vsub.f32 %v693, %v965
    %967 = vmatpush1.msra.mxu0 %v966
    %968 = vmatprep.subr.mxu0 0.0
    %v969 = vand.u32 %v694, 4294901760
    %v970 = vsub.f32 %v694, %v969
    %971 = vmatpush1.msra.mxu0 %v970
    %972 = vmatprep.subr.mxu0 0.0
    %v973 = vand.u32 %v695, 4294901760
    %v974 = vsub.f32 %v695, %v973
    %975 = vmatpush1.msra.mxu0 %v974
    %976 = vmatprep.subr.mxu0 0.0
    %v977 = vand.u32 %v696, 4294901760
    %v978 = vsub.f32 %v696, %v977
    %979 = vmatpush1.msra.mxu0 %v978
    %980 = vmatprep.subr.mxu0 0.0
    %v981 = vand.u32 %v697, 4294901760
    %v982 = vsub.f32 %v697, %v981
    %983 = vmatpush1.msra.mxu0 %v982
    %984 = vmatprep.subr.mxu0 0.0
    %v985 = vand.u32 %v698, 4294901760
    %v986 = vsub.f32 %v698, %v985
    %987 = vmatpush1.msra.mxu0 %v986
    %988 = vmatprep.subr.mxu0 0.0
    %v989 = vand.u32 %v699, 4294901760
    %v990 = vsub.f32 %v699, %v989
    %991 = vmatpush1.msra.mxu0 %v990
    %992 = vmatprep.subr.mxu0 0.0
    %v993 = vand.u32 %v700, 4294901760
    %v994 = vsub.f32 %v700, %v993
    %995 = vmatpush1.msra.mxu0 %v994
    %996 = vmatprep.subr.mxu0 0.0
    %v997 = vand.u32 %v701, 4294901760
    %v998 = vsub.f32 %v701, %v997
    %999 = vmatpush1.msra.mxu0 %v998
    %1000 = vmatprep.subr.mxu0 0.0
    %v1001 = vand.u32 %v702, 4294901760
    %v1002 = vsub.f32 %v702, %v1001
    %1003 = vmatpush1.msra.mxu0 %v1002
    %1004 = vmatprep.subr.mxu0 0.0
    %v1005 = vand.u32 %v703, 4294901760
    %v1006 = vsub.f32 %v703, %v1005
    %1007 = vmatpush1.msra.mxu0 %v1006
    %1008 = vmatprep.subr.mxu0 0.0
    %v1009 = vand.u32 %v704, 4294901760
    %v1010 = vsub.f32 %v704, %v1009
    %1011 = vmatpush1.msra.mxu0 %v1010
    %1012 = vmatprep.subr.mxu0 0.0
    %v1013 = vand.u32 %v705, 4294901760
    %v1014 = vsub.f32 %v705, %v1013
    %1015 = vmatpush1.msra.mxu0 %v1014
    %1016 = vmatprep.subr.mxu0 0.0
    %1017 = vmatpush1.msra.mxu0 0.0
    %1018 = vmatprep.subr.mxu0 0.0
    %1019 = vmatpush1.msra.mxu0 0.0
    %1020 = vmatprep.subr.mxu0 0.0
    %1021 = vmatpush1.msra.mxu0 0.0
    %1022 = vmatprep.subr.mxu0 0.0
    %1023 = vmatpush1.msra.mxu0 0.0
    %1024 = vmatprep.subr.mxu0 0.0
    %1025 = vmatpush1.msra.mxu0 0.0
    %1026 = vmatprep.subr.mxu0 0.0
    %1027 = vmatpush1.msra.mxu0 0.0
    %1028 = vmatprep.subr.mxu0 0.0
    %1029 = vmatpush1.msra.mxu0 0.0
    %1030 = vmatprep.subr.mxu0 0.0
    %1031 = vmatpush1.msra.mxu0 0.0
    %1032 = vmatprep.subr.mxu0 0.0
    %1033 = vmatpush1.msra.mxu0 0.0
    %1034 = vmatprep.subr.mxu0 0.0
    %1035 = vmatpush1.msra.mxu0 0.0
    %1036 = vmatprep.subr.mxu0 0.0
    %1037 = vmatpush1.msra.mxu0 0.0
    %1038 = vmatprep.subr.mxu0 0.0
    %1039 = vmatpush1.msra.mxu0 0.0
    %1040 = vmatprep.subr.mxu0 0.0
    %1041 = vmatpush1.msra.mxu0 0.0
    %1042 = vmatprep.subr.mxu0 0.0
    %1043 = vmatpush1.msra.mxu0 0.0
    %1044 = vmatprep.subr.mxu0 0.0
    %1045 = vmatpush1.msra.mxu0 0.0
    %1046 = vmatprep.subr.mxu0 0.0
    %1047 = vmatpush1.msra.mxu0 0.0
    %1048 = vmatprep.mubr.f32.mxu0 0.0
    %v1049 = vand.u32 %v689, 4294901760
    %v1050 = vsub.f32 %v689, %v1049
    %1051 = vmatmul.mubr.f32.gmra.mrb[0].mxu0 %v1050
    %v1052 = vpop.f32.mrb[0].mxu0
    %v1053 = vadd.f32 %v949, %v1052
    %v1054 = vpop.f32.mrb[0].mxu0
    %1055 = vdwg.mxu0
    %1056 = vmatprep.subr.mxu0 0.0
    %v1057 = vand.u32 %v690, 4294901760
    %1058 = vmatpush1.msra.mxu0 %v1057
    %1059 = vmatprep.subr.mxu0 0.0
    %v1060 = vand.u32 %v691, 4294901760
    %1061 = vmatpush1.msra.mxu0 %v1060
    %1062 = vmatprep.subr.mxu0 0.0
    %v1063 = vand.u32 %v692, 4294901760
    %1064 = vmatpush1.msra.mxu0 %v1063
    %1065 = vmatprep.subr.mxu0 0.0
    %v1066 = vand.u32 %v693, 4294901760
    %1067 = vmatpush1.msra.mxu0 %v1066
    %1068 = vmatprep.subr.mxu0 0.0
    %v1069 = vand.u32 %v694, 4294901760
    %1070 = vmatpush1.msra.mxu0 %v1069
    %1071 = vmatprep.subr.mxu0 0.0
    %v1072 = vand.u32 %v695, 4294901760
    %1073 = vmatpush1.msra.mxu0 %v1072
    %1074 = vmatprep.subr.mxu0 0.0
    %v1075 = vand.u32 %v696, 4294901760
    %1076 = vmatpush1.msra.mxu0 %v1075
    %1077 = vmatprep.subr.mxu0 0.0
    %v1078 = vand.u32 %v697, 4294901760
    %1079 = vmatpush1.msra.mxu0 %v1078
    %1080 = vmatprep.subr.mxu0 0.0
    %v1081 = vand.u32 %v698, 4294901760
    %1082 = vmatpush1.msra.mxu0 %v1081
    %1083 = vmatprep.subr.mxu0 0.0
    %v1084 = vand.u32 %v699, 4294901760
    %1085 = vmatpush1.msra.mxu0 %v1084
    %1086 = vmatprep.subr.mxu0 0.0
    %v1087 = vand.u32 %v700, 4294901760
    %1088 = vmatpush1.msra.mxu0 %v1087
    %1089 = vmatprep.subr.mxu0 0.0
    %v1090 = vand.u32 %v701, 4294901760
    %1091 = vmatpush1.msra.mxu0 %v1090
    %1092 = vmatprep.subr.mxu0 0.0
    %v1093 = vand.u32 %v702, 4294901760
    %1094 = vmatpush1.msra.mxu0 %v1093
    %1095 = vmatprep.subr.mxu0 0.0
    %v1096 = vand.u32 %v703, 4294901760
    %1097 = vmatpush1.msra.mxu0 %v1096
    %1098 = vmatprep.subr.mxu0 0.0
    %v1099 = vand.u32 %v704, 4294901760
    %1100 = vmatpush1.msra.mxu0 %v1099
    %1101 = vmatprep.subr.mxu0 0.0
    %v1102 = vand.u32 %v705, 4294901760
    %1103 = vmatpush1.msra.mxu0 %v1102
    %1104 = vmatprep.subr.mxu0 0.0
    %1105 = vmatpush1.msra.mxu0 0.0
    %1106 = vmatprep.subr.mxu0 0.0
    %1107 = vmatpush1.msra.mxu0 0.0
    %1108 = vmatprep.subr.mxu0 0.0
    %1109 = vmatpush1.msra.mxu0 0.0
    %1110 = vmatprep.subr.mxu0 0.0
    %1111 = vmatpush1.msra.mxu0 0.0
    %1112 = vmatprep.subr.mxu0 0.0
    %1113 = vmatpush1.msra.mxu0 0.0
    %1114 = vmatprep.subr.mxu0 0.0
    %1115 = vmatpush1.msra.mxu0 0.0
    %1116 = vmatprep.subr.mxu0 0.0
    %1117 = vmatpush1.msra.mxu0 0.0
    %1118 = vmatprep.subr.mxu0 0.0
    %1119 = vmatpush1.msra.mxu0 0.0
    %1120 = vmatprep.subr.mxu0 0.0
    %1121 = vmatpush1.msra.mxu0 0.0
    %1122 = vmatprep.subr.mxu0 0.0
    %1123 = vmatpush1.msra.mxu0 0.0
    %1124 = vmatprep.subr.mxu0 0.0
    %1125 = vmatpush1.msra.mxu0 0.0
    %1126 = vmatprep.subr.mxu0 0.0
    %1127 = vmatpush1.msra.mxu0 0.0
    %1128 = vmatprep.subr.mxu0 0.0
    %1129 = vmatpush1.msra.mxu0 0.0
    %1130 = vmatprep.subr.mxu0 0.0
    %1131 = vmatpush1.msra.mxu0 0.0
    %1132 = vmatprep.subr.mxu0 0.0
    %1133 = vmatpush1.msra.mxu0 0.0
    %1134 = vmatprep.subr.mxu0 0.0
    %1135 = vmatpush1.msra.mxu0 0.0
    %1136 = vmatprep.mubr.f32.mxu0 0.0
    %v1137 = vand.u32 %v689, 4294901760
    %v1138 = vsub.f32 %v689, %v1137
    %v1139 = vand.u32 %v1138, 4294901760
    %1140 = vmatmul.mubr.f32.gmra.mrb[0].mxu0 %v1139
    %v1141 = vpop.f32.mrb[0].mxu0
    %v1142 = vadd.f32 %v1053, %v1141
    %v1143 = vpop.f32.mrb[0].mxu0
    %1144 = vdwg.mxu0
    %1145 = vmatprep.subr.mxu0 0.0
    %v1146 = vand.u32 %v690, 4294901760
    %v1147 = vsub.f32 %v690, %v1146
    %v1148 = vand.u32 %v1147, 4294901760
    %1149 = vmatpush1.msra.mxu0 %v1148
    %1150 = vmatprep.subr.mxu0 0.0
    %v1151 = vand.u32 %v691, 4294901760
    %v1152 = vsub.f32 %v691, %v1151
    %v1153 = vand.u32 %v1152, 4294901760
    %1154 = vmatpush1.msra.mxu0 %v1153
    %1155 = vmatprep.subr.mxu0 0.0
    %v1156 = vand.u32 %v692, 4294901760
    %v1157 = vsub.f32 %v692, %v1156
    %v1158 = vand.u32 %v1157, 4294901760
    %1159 = vmatpush1.msra.mxu0 %v1158
    %1160 = vmatprep.subr.mxu0 0.0
    %v1161 = vand.u32 %v693, 4294901760
    %v1162 = vsub.f32 %v693, %v1161
    %v1163 = vand.u32 %v1162, 4294901760
    %1164 = vmatpush1.msra.mxu0 %v1163
    %1165 = vmatprep.subr.mxu0 0.0
    %v1166 = vand.u32 %v694, 4294901760
    %v1167 = vsub.f32 %v694, %v1166
    %v1168 = vand.u32 %v1167, 4294901760
    %1169 = vmatpush1.msra.mxu0 %v1168
    %1170 = vmatprep.subr.mxu0 0.0
    %v1171 = vand.u32 %v695, 4294901760
    %v1172 = vsub.f32 %v695, %v1171
    %v1173 = vand.u32 %v1172, 4294901760
    %1174 = vmatpush1.msra.mxu0 %v1173
    %1175 = vmatprep.subr.mxu0 0.0
    %v1176 = vand.u32 %v696, 4294901760
    %v1177 = vsub.f32 %v696, %v1176
    %v1178 = vand.u32 %v1177, 4294901760
    %1179 = vmatpush1.msra.mxu0 %v1178
    %1180 = vmatprep.subr.mxu0 0.0
    %v1181 = vand.u32 %v697, 4294901760
    %v1182 = vsub.f32 %v697, %v1181
    %v1183 = vand.u32 %v1182, 4294901760
    %1184 = vmatpush1.msra.mxu0 %v1183
    %1185 = vmatprep.subr.mxu0 0.0
    %v1186 = vand.u32 %v698, 4294901760
    %v1187 = vsub.f32 %v698, %v1186
    %v1188 = vand.u32 %v1187, 4294901760
    %1189 = vmatpush1.msra.mxu0 %v1188
    %1190 = vmatprep.subr.mxu0 0.0
    %v1191 = vand.u32 %v699, 4294901760
    %v1192 = vsub.f32 %v699, %v1191
    %v1193 = vand.u32 %v1192, 4294901760
    %1194 = vmatpush1.msra.mxu0 %v1193
    %1195 = vmatprep.subr.mxu0 0.0
    %v1196 = vand.u32 %v700, 4294901760
    %v1197 = vsub.f32 %v700, %v1196
    %v1198 = vand.u32 %v1197, 4294901760
    %1199 = vmatpush1.msra.mxu0 %v1198
    %1200 = vmatprep.subr.mxu0 0.0
    %v1201 = vand.u32 %v701, 4294901760
    %v1202 = vsub.f32 %v701, %v1201
    %v1203 = vand.u32 %v1202, 4294901760
    %1204 = vmatpush1.msra.mxu0 %v1203
    %1205 = vmatprep.subr.mxu0 0.0
    %v1206 = vand.u32 %v702, 4294901760
    %v1207 = vsub.f32 %v702, %v1206
    %v1208 = vand.u32 %v1207, 4294901760
    %1209 = vmatpush1.msra.mxu0 %v1208
    %1210 = vmatprep.subr.mxu0 0.0
    %v1211 = vand.u32 %v703, 4294901760
    %v1212 = vsub.f32 %v703, %v1211
    %v1213 = vand.u32 %v1212, 4294901760
    %1214 = vmatpush1.msra.mxu0 %v1213
    %1215 = vmatprep.subr.mxu0 0.0
    %v1216 = vand.u32 %v704, 4294901760
    %v1217 = vsub.f32 %v704, %v1216
    %v1218 = vand.u32 %v1217, 4294901760
    %1219 = vmatpush1.msra.mxu0 %v1218
    %1220 = vmatprep.subr.mxu0 0.0
    %v1221 = vand.u32 %v705, 4294901760
    %v1222 = vsub.f32 %v705, %v1221
    %v1223 = vand.u32 %v1222, 4294901760
    %1224 = vmatpush1.msra.mxu0 %v1223
    %1225 = vmatprep.subr.mxu0 0.0
    %1226 = vmatpush1.msra.mxu0 0.0
    %1227 = vmatprep.subr.mxu0 0.0
    %1228 = vmatpush1.msra.mxu0 0.0
    %1229 = vmatprep.subr.mxu0 0.0
    %1230 = vmatpush1.msra.mxu0 0.0
    %1231 = vmatprep.subr.mxu0 0.0
    %1232 = vmatpush1.msra.mxu0 0.0
    %1233 = vmatprep.subr.mxu0 0.0
    %1234 = vmatpush1.msra.mxu0 0.0
    %1235 = vmatprep.subr.mxu0 0.0
    %1236 = vmatpush1.msra.mxu0 0.0
    %1237 = vmatprep.subr.mxu0 0.0
    %1238 = vmatpush1.msra.mxu0 0.0
    %1239 = vmatprep.subr.mxu0 0.0
    %1240 = vmatpush1.msra.mxu0 0.0
    %1241 = vmatprep.subr.mxu0 0.0
    %1242 = vmatpush1.msra.mxu0 0.0
    %1243 = vmatprep.subr.mxu0 0.0
    %1244 = vmatpush1.msra.mxu0 0.0
    %1245 = vmatprep.subr.mxu0 0.0
    %1246 = vmatpush1.msra.mxu0 0.0
    %1247 = vmatprep.subr.mxu0 0.0
    %1248 = vmatpush1.msra.mxu0 0.0
    %1249 = vmatprep.subr.mxu0 0.0
    %1250 = vmatpush1.msra.mxu0 0.0
    %1251 = vmatprep.subr.mxu0 0.0
    %1252 = vmatpush1.msra.mxu0 0.0
    %1253 = vmatprep.subr.mxu0 0.0
    %1254 = vmatpush1.msra.mxu0 0.0
    %1255 = vmatprep.subr.mxu0 0.0
    %1256 = vmatpush1.msra.mxu0 0.0
    %1257 = vmatprep.mubr.f32.mxu0 0.0
    %v1258 = vand.u32 %v689, 4294901760
    %1259 = vmatmul.mubr.f32.gmra.mrb[0].mxu0 %v1258
    %v1260 = vpop.f32.mrb[0].mxu0
    %v1261 = vadd.f32 %v1142, %v1260
    %v1262 = vpop.f32.mrb[0].mxu0
    %1263 = vdwg.mxu0
    %1264 = vmatprep.subr.mxu0 0.0
    %v1265 = vand.u32 %v690, 4294901760
    %1266 = vmatpush1.msra.mxu0 %v1265
    %1267 = vmatprep.subr.mxu0 0.0
    %v1268 = vand.u32 %v691, 4294901760
    %1269 = vmatpush1.msra.mxu0 %v1268
    %1270 = vmatprep.subr.mxu0 0.0
    %v1271 = vand.u32 %v692, 4294901760
    %1272 = vmatpush1.msra.mxu0 %v1271
    %1273 = vmatprep.subr.mxu0 0.0
    %v1274 = vand.u32 %v693, 4294901760
    %1275 = vmatpush1.msra.mxu0 %v1274
    %1276 = vmatprep.subr.mxu0 0.0
    %v1277 = vand.u32 %v694, 4294901760
    %1278 = vmatpush1.msra.mxu0 %v1277
    %1279 = vmatprep.subr.mxu0 0.0
    %v1280 = vand.u32 %v695, 4294901760
    %1281 = vmatpush1.msra.mxu0 %v1280
    %1282 = vmatprep.subr.mxu0 0.0
    %v1283 = vand.u32 %v696, 4294901760
    %1284 = vmatpush1.msra.mxu0 %v1283
    %1285 = vmatprep.subr.mxu0 0.0
    %v1286 = vand.u32 %v697, 4294901760
    %1287 = vmatpush1.msra.mxu0 %v1286
    %1288 = vmatprep.subr.mxu0 0.0
    %v1289 = vand.u32 %v698, 4294901760
    %1290 = vmatpush1.msra.mxu0 %v1289
    %1291 = vmatprep.subr.mxu0 0.0
    %v1292 = vand.u32 %v699, 4294901760
    %1293 = vmatpush1.msra.mxu0 %v1292
    %1294 = vmatprep.subr.mxu0 0.0
    %v1295 = vand.u32 %v700, 4294901760
    %1296 = vmatpush1.msra.mxu0 %v1295
    %1297 = vmatprep.subr.mxu0 0.0
    %v1298 = vand.u32 %v701, 4294901760
    %1299 = vmatpush1.msra.mxu0 %v1298
    %1300 = vmatprep.subr.mxu0 0.0
    %v1301 = vand.u32 %v702, 4294901760
    %1302 = vmatpush1.msra.mxu0 %v1301
    %1303 = vmatprep.subr.mxu0 0.0
    %v1304 = vand.u32 %v703, 4294901760
    %1305 = vmatpush1.msra.mxu0 %v1304
    %1306 = vmatprep.subr.mxu0 0.0
    %v1307 = vand.u32 %v704, 4294901760
    %1308 = vmatpush1.msra.mxu0 %v1307
    %1309 = vmatprep.subr.mxu0 0.0
    %v1310 = vand.u32 %v705, 4294901760
    %1311 = vmatpush1.msra.mxu0 %v1310
    %1312 = vmatprep.subr.mxu0 0.0
    %1313 = vmatpush1.msra.mxu0 0.0
    %1314 = vmatprep.subr.mxu0 0.0
    %1315 = vmatpush1.msra.mxu0 0.0
    %1316 = vmatprep.subr.mxu0 0.0
    %1317 = vmatpush1.msra.mxu0 0.0
    %1318 = vmatprep.subr.mxu0 0.0
    %1319 = vmatpush1.msra.mxu0 0.0
    %1320 = vmatprep.subr.mxu0 0.0
    %1321 = vmatpush1.msra.mxu0 0.0
    %1322 = vmatprep.subr.mxu0 0.0
    %1323 = vmatpush1.msra.mxu0 0.0
    %1324 = vmatprep.subr.mxu0 0.0
    %1325 = vmatpush1.msra.mxu0 0.0
    %1326 = vmatprep.subr.mxu0 0.0
    %1327 = vmatpush1.msra.mxu0 0.0
    %1328 = vmatprep.subr.mxu0 0.0
    %1329 = vmatpush1.msra.mxu0 0.0
    %1330 = vmatprep.subr.mxu0 0.0
    %1331 = vmatpush1.msra.mxu0 0.0
    %1332 = vmatprep.subr.mxu0 0.0
    %1333 = vmatpush1.msra.mxu0 0.0
    %1334 = vmatprep.subr.mxu0 0.0
    %1335 = vmatpush1.msra.mxu0 0.0
    %1336 = vmatprep.subr.mxu0 0.0
    %1337 = vmatpush1.msra.mxu0 0.0
    %1338 = vmatprep.subr.mxu0 0.0
    %1339 = vmatpush1.msra.mxu0 0.0
    %1340 = vmatprep.subr.mxu0 0.0
    %1341 = vmatpush1.msra.mxu0 0.0
    %1342 = vmatprep.subr.mxu0 0.0
    %1343 = vmatpush1.msra.mxu0 0.0
    %1344 = vmatprep.mubr.f32.mxu0 0.0
    %v1345 = vand.u32 %v689, 4294901760
    %1346 = vmatmul.mubr.f32.gmra.mrb[0].mxu0 %v1345
    %v1347 = vpop.f32.mrb[0].mxu0
    %v1348 = vadd.f32 %v1261, %v1347
    %v1349 = vpop.f32.mrb[0].mxu0
    %1350 = vdwg.mxu0
    %v1351 = vmul.f32 %v1348, 0.2
    %v1352 = vmax.f32 %v1348, %v1351
    %v1353 = vld [vmem:[#allocation2 + $0x100] sm:$0xff]
    %v1354 = vld [vmem:[#allocation2 + $0x108] sm:$0xff]
    %v1355 = vld [vmem:[#allocation2 + $0x110] sm:$0xff]
    %v1356 = vld [vmem:[#allocation2 + $0x118] sm:$0xff]
    %v1357 = vld [vmem:[#allocation2 + $0x120] sm:$0xff]
    %v1358 = vld [vmem:[#allocation2 + $0x128] sm:$0xff]
    %v1359 = vld [vmem:[#allocation2 + $0x130] sm:$0xff]
    %v1360 = vld [vmem:[#allocation2 + $0x138] sm:$0xff]
    %v1361 = vld [vmem:[#allocation2 + $0x140] sm:$0xff]
    %v1362 = vld [vmem:[#allocation2 + $0x148] sm:$0xff]
    %v1363 = vld [vmem:[#allocation2 + $0x150] sm:$0xff]
    %v1364 = vld [vmem:[#allocation2 + $0x158] sm:$0xff]
    %v1365 = vld [vmem:[#allocation2 + $0x160] sm:$0xff]
    %v1366 = vld [vmem:[#allocation2 + $0x168] sm:$0xff]
    %v1367 = vld [vmem:[#allocation2 + $0x170] sm:$0xff]
    %v1368 = vld [vmem:[#allocation2 + $0x178] sm:$0xff]
    %v1369 = vlaneseq
    %v1370 = vshrl.u32 %v1369, 7
    %v1371 = vsub.s32 2, %v1370
    %v1372 = vrot.slane %v25, %v1371
    %1373 = vmatprep.subr.mxu0 0.0
    %v1374 = vand.u32 %v1353, 4294901760
    %1375 = vmatpush1.msra.mxu0 %v1374
    %1376 = vmatprep.subr.mxu0 0.0
    %v1377 = vand.u32 %v1354, 4294901760
    %1378 = vmatpush1.msra.mxu0 %v1377
    %1379 = vmatprep.subr.mxu0 0.0
    %v1380 = vand.u32 %v1355, 4294901760
    %1381 = vmatpush1.msra.mxu0 %v1380
    %1382 = vmatprep.subr.mxu0 0.0
    %v1383 = vand.u32 %v1356, 4294901760
    %1384 = vmatpush1.msra.mxu0 %v1383
    %1385 = vmatprep.subr.mxu0 0.0
    %v1386 = vand.u32 %v1357, 4294901760
    %1387 = vmatpush1.msra.mxu0 %v1386
    %1388 = vmatprep.subr.mxu0 0.0
    %v1389 = vand.u32 %v1358, 4294901760
    %1390 = vmatpush1.msra.mxu0 %v1389
    %1391 = vmatprep.subr.mxu0 0.0
    %v1392 = vand.u32 %v1359, 4294901760
    %1393 = vmatpush1.msra.mxu0 %v1392
    %1394 = vmatprep.subr.mxu0 0.0
    %v1395 = vand.u32 %v1360, 4294901760
    %1396 = vmatpush1.msra.mxu0 %v1395
    %1397 = vmatprep.subr.mxu0 0.0
    %v1398 = vand.u32 %v1361, 4294901760
    %1399 = vmatpush1.msra.mxu0 %v1398
    %1400 = vmatprep.subr.mxu0 0.0
    %v1401 = vand.u32 %v1362, 4294901760
    %1402 = vmatpush1.msra.mxu0 %v1401
    %1403 = vmatprep.subr.mxu0 0.0
    %v1404 = vand.u32 %v1363, 4294901760
    %1405 = vmatpush1.msra.mxu0 %v1404
    %1406 = vmatprep.subr.mxu0 0.0
    %v1407 = vand.u32 %v1364, 4294901760
    %1408 = vmatpush1.msra.mxu0 %v1407
    %1409 = vmatprep.subr.mxu0 0.0
    %v1410 = vand.u32 %v1365, 4294901760
    %1411 = vmatpush1.msra.mxu0 %v1410
    %1412 = vmatprep.subr.mxu0 0.0
    %v1413 = vand.u32 %v1366, 4294901760
    %1414 = vmatpush1.msra.mxu0 %v1413
    %1415 = vmatprep.subr.mxu0 0.0
    %v1416 = vand.u32 %v1367, 4294901760
    %1417 = vmatpush1.msra.mxu0 %v1416
    %1418 = vmatprep.subr.mxu0 0.0
    %v1419 = vand.u32 %v1368, 4294901760
    %1420 = vmatpush1.msra.mxu0 %v1419
    %1421 = vmatprep.subr.mxu0 0.0
    %1422 = vmatpush1.msra.mxu0 0.0
    %1423 = vmatprep.subr.mxu0 0.0
    %1424 = vmatpush1.msra.mxu0 0.0
    %1425 = vmatprep.subr.mxu0 0.0
    %1426 = vmatpush1.msra.mxu0 0.0
    %1427 = vmatprep.subr.mxu0 0.0
    %1428 = vmatpush1.msra.mxu0 0.0
    %1429 = vmatprep.subr.mxu0 0.0
    %1430 = vmatpush1.msra.mxu0 0.0
    %1431 = vmatprep.subr.mxu0 0.0
    %1432 = vmatpush1.msra.mxu0 0.0
    %1433 = vmatprep.subr.mxu0 0.0
    %1434 = vmatpush1.msra.mxu0 0.0
    %1435 = vmatprep.subr.mxu0 0.0
    %1436 = vmatpush1.msra.mxu0 0.0
    %1437 = vmatprep.subr.mxu0 0.0
    %1438 = vmatpush1.msra.mxu0 0.0
    %1439 = vmatprep.subr.mxu0 0.0
    %1440 = vmatpush1.msra.mxu0 0.0
    %1441 = vmatprep.subr.mxu0 0.0
    %1442 = vmatpush1.msra.mxu0 0.0
    %1443 = vmatprep.subr.mxu0 0.0
    %1444 = vmatpush1.msra.mxu0 0.0
    %1445 = vmatprep.subr.mxu0 0.0
    %1446 = vmatpush1.msra.mxu0 0.0
    %1447 = vmatprep.subr.mxu0 0.0
    %1448 = vmatpush1.msra.mxu0 0.0
    %1449 = vmatprep.subr.mxu0 0.0
    %1450 = vmatpush1.msra.mxu0 0.0
    %1451 = vmatprep.subr.mxu0 0.0
    %1452 = vmatpush1.msra.mxu0 0.0
    %1453 = vmatprep.mubr.f32.mxu0 0.0
    %v1454 = vand.u32 %v1352, 4294901760
    %v1455 = vsub.f32 %v1352, %v1454
    %v1456 = vand.u32 %v1455, 4294901760
    %v1457 = vsub.f32 %v1455, %v1456
    %v1458 = vand.u32 %v1457, 4294901760
    %1459 = vmatmul.mubr.f32.gmra.mrb[0].mxu0 %v1458
    %v1460 = vpop.f32.mrb[0].mxu0
    %v1461 = vadd.f32 %v1372, %v1460
    %v1462 = vpop.f32.mrb[0].mxu0
    %1463 = vdwg.mxu0
    %1464 = vmatprep.subr.mxu0 0.0
    %v1465 = vand.u32 %v1353, 4294901760
    %v1466 = vsub.f32 %v1353, %v1465
    %v1467 = vand.u32 %v1466, 4294901760
    %v1468 = vsub.f32 %v1466, %v1467
    %v1469 = vand.u32 %v1468, 4294901760
    %1470 = vmatpush1.msra.mxu0 %v1469
    %1471 = vmatprep.subr.mxu0 0.0
    %v1472 = vand.u32 %v1354, 4294901760
    %v1473 = vsub.f32 %v1354, %v1472
    %v1474 = vand.u32 %v1473, 4294901760
    %v1475 = vsub.f32 %v1473, %v1474
    %v1476 = vand.u32 %v1475, 4294901760
    %1477 = vmatpush1.msra.mxu0 %v1476
    %1478 = vmatprep.subr.mxu0 0.0
    %v1479 = vand.u32 %v1355, 4294901760
    %v1480 = vsub.f32 %v1355, %v1479
    %v1481 = vand.u32 %v1480, 4294901760
    %v1482 = vsub.f32 %v1480, %v1481
    %v1483 = vand.u32 %v1482, 4294901760
    %1484 = vmatpush1.msra.mxu0 %v1483
    %1485 = vmatprep.subr.mxu0 0.0
    %v1486 = vand.u32 %v1356, 4294901760
    %v1487 = vsub.f32 %v1356, %v1486
    %v1488 = vand.u32 %v1487, 4294901760
    %v1489 = vsub.f32 %v1487, %v1488
    %v1490 = vand.u32 %v1489, 4294901760
    %1491 = vmatpush1.msra.mxu0 %v1490
    %1492 = vmatprep.subr.mxu0 0.0
    %v1493 = vand.u32 %v1357, 4294901760
    %v1494 = vsub.f32 %v1357, %v1493
    %v1495 = vand.u32 %v1494, 4294901760
    %v1496 = vsub.f32 %v1494, %v1495
    %v1497 = vand.u32 %v1496, 4294901760
    %1498 = vmatpush1.msra.mxu0 %v1497
    %1499 = vmatprep.subr.mxu0 0.0
    %v1500 = vand.u32 %v1358, 4294901760
    %v1501 = vsub.f32 %v1358, %v1500
    %v1502 = vand.u32 %v1501, 4294901760
    %v1503 = vsub.f32 %v1501, %v1502
    %v1504 = vand.u32 %v1503, 4294901760
    %1505 = vmatpush1.msra.mxu0 %v1504
    %1506 = vmatprep.subr.mxu0 0.0
    %v1507 = vand.u32 %v1359, 4294901760
    %v1508 = vsub.f32 %v1359, %v1507
    %v1509 = vand.u32 %v1508, 4294901760
    %v1510 = vsub.f32 %v1508, %v1509
    %v1511 = vand.u32 %v1510, 4294901760
    %1512 = vmatpush1.msra.mxu0 %v1511
    %1513 = vmatprep.subr.mxu0 0.0
    %v1514 = vand.u32 %v1360, 4294901760
    %v1515 = vsub.f32 %v1360, %v1514
    %v1516 = vand.u32 %v1515, 4294901760
    %v1517 = vsub.f32 %v1515, %v1516
    %v1518 = vand.u32 %v1517, 4294901760
    %1519 = vmatpush1.msra.mxu0 %v1518
    %1520 = vmatprep.subr.mxu0 0.0
    %v1521 = vand.u32 %v1361, 4294901760
    %v1522 = vsub.f32 %v1361, %v1521
    %v1523 = vand.u32 %v1522, 4294901760
    %v1524 = vsub.f32 %v1522, %v1523
    %v1525 = vand.u32 %v1524, 4294901760
    %1526 = vmatpush1.msra.mxu0 %v1525
    %1527 = vmatprep.subr.mxu0 0.0
    %v1528 = vand.u32 %v1362, 4294901760
    %v1529 = vsub.f32 %v1362, %v1528
    %v1530 = vand.u32 %v1529, 4294901760
    %v1531 = vsub.f32 %v1529, %v1530
    %v1532 = vand.u32 %v1531, 4294901760
    %1533 = vmatpush1.msra.mxu0 %v1532
    %1534 = vmatprep.subr.mxu0 0.0
    %v1535 = vand.u32 %v1363, 4294901760
    %v1536 = vsub.f32 %v1363, %v1535
    %v1537 = vand.u32 %v1536, 4294901760
    %v1538 = vsub.f32 %v1536, %v1537
    %v1539 = vand.u32 %v1538, 4294901760
    %1540 = vmatpush1.msra.mxu0 %v1539
    %1541 = vmatprep.subr.mxu0 0.0
    %v1542 = vand.u32 %v1364, 4294901760
    %v1543 = vsub.f32 %v1364, %v1542
    %v1544 = vand.u32 %v1543, 4294901760
    %v1545 = vsub.f32 %v1543, %v1544
    %v1546 = vand.u32 %v1545, 4294901760
    %1547 = vmatpush1.msra.mxu0 %v1546
    %1548 = vmatprep.subr.mxu0 0.0
    %v1549 = vand.u32 %v1365, 4294901760
    %v1550 = vsub.f32 %v1365, %v1549
    %v1551 = vand.u32 %v1550, 4294901760
    %v1552 = vsub.f32 %v1550, %v1551
    %v1553 = vand.u32 %v1552, 4294901760
    %1554 = vmatpush1.msra.mxu0 %v1553
    %1555 = vmatprep.subr.mxu0 0.0
    %v1556 = vand.u32 %v1366, 4294901760
    %v1557 = vsub.f32 %v1366, %v1556
    %v1558 = vand.u32 %v1557, 4294901760
    %v1559 = vsub.f32 %v1557, %v1558
    %v1560 = vand.u32 %v1559, 4294901760
    %1561 = vmatpush1.msra.mxu0 %v1560
    %1562 = vmatprep.subr.mxu0 0.0
    %v1563 = vand.u32 %v1367, 4294901760
    %v1564 = vsub.f32 %v1367, %v1563
    %v1565 = vand.u32 %v1564, 4294901760
    %v1566 = vsub.f32 %v1564, %v1565
    %v1567 = vand.u32 %v1566, 4294901760
    %1568 = vmatpush1.msra.mxu0 %v1567
    %1569 = vmatprep.subr.mxu0 0.0
    %v1570 = vand.u32 %v1368, 4294901760
    %v1571 = vsub.f32 %v1368, %v1570
    %v1572 = vand.u32 %v1571, 4294901760
    %v1573 = vsub.f32 %v1571, %v1572
    %v1574 = vand.u32 %v1573, 4294901760
    %1575 = vmatpush1.msra.mxu0 %v1574
    %1576 = vmatprep.subr.mxu0 0.0
    %1577 = vmatpush1.msra.mxu0 0.0
    %1578 = vmatprep.subr.mxu0 0.0
    %1579 = vmatpush1.msra.mxu0 0.0
    %1580 = vmatprep.subr.mxu0 0.0
    %1581 = vmatpush1.msra.mxu0 0.0
    %1582 = vmatprep.subr.mxu0 0.0
    %1583 = vmatpush1.msra.mxu0 0.0
    %1584 = vmatprep.subr.mxu0 0.0
    %1585 = vmatpush1.msra.mxu0 0.0
    %1586 = vmatprep.subr.mxu0 0.0
    %1587 = vmatpush1.msra.mxu0 0.0
    %1588 = vmatprep.subr.mxu0 0.0
    %1589 = vmatpush1.msra.mxu0 0.0
    %1590 = vmatprep.subr.mxu0 0.0
    %1591 = vmatpush1.msra.mxu0 0.0
    %1592 = vmatprep.subr.mxu0 0.0
    %1593 = vmatpush1.msra.mxu0 0.0
    %1594 = vmatprep.subr.mxu0 0.0
    %1595 = vmatpush1.msra.mxu0 0.0
    %1596 = vmatprep.subr.mxu0 0.0
    %1597 = vmatpush1.msra.mxu0 0.0
    %1598 = vmatprep.subr.mxu0 0.0
    %1599 = vmatpush1.msra.mxu0 0.0
    %1600 = vmatprep.subr.mxu0 0.0
    %1601 = vmatpush1.msra.mxu0 0.0
    %1602 = vmatprep.subr.mxu0 0.0
    %1603 = vmatpush1.msra.mxu0 0.0
    %1604 = vmatprep.subr.mxu0 0.0
    %1605 = vmatpush1.msra.mxu0 0.0
    %1606 = vmatprep.subr.mxu0 0.0
    %1607 = vmatpush1.msra.mxu0 0.0
    %1608 = vmatprep.mubr.f32.mxu0 0.0
    %v1609 = vand.u32 %v1352, 4294901760
    %1610 = vmatmul.mubr.f32.gmra.mrb[0].mxu0 %v1609
    %v1611 = vpop.f32.mrb[0].mxu0
    %v1612 = vadd.f32 %v1461, %v1611
    %v1613 = vpop.f32.mrb[0].mxu0
    %1614 = vdwg.mxu0
    %1615 = vmatprep.subr.mxu0 0.0
    %v1616 = vand.u32 %v1353, 4294901760
    %v1617 = vsub.f32 %v1353, %v1616
    %1618 = vmatpush1.msra.mxu0 %v1617
    %1619 = vmatprep.subr.mxu0 0.0
    %v1620 = vand.u32 %v1354, 4294901760
    %v1621 = vsub.f32 %v1354, %v1620
    %1622 = vmatpush1.msra.mxu0 %v1621
    %1623 = vmatprep.subr.mxu0 0.0
    %v1624 = vand.u32 %v1355, 4294901760
    %v1625 = vsub.f32 %v1355, %v1624
    %1626 = vmatpush1.msra.mxu0 %v1625
    %1627 = vmatprep.subr.mxu0 0.0
    %v1628 = vand.u32 %v1356, 4294901760
    %v1629 = vsub.f32 %v1356, %v1628
    %1630 = vmatpush1.msra.mxu0 %v1629
    %1631 = vmatprep.subr.mxu0 0.0
    %v1632 = vand.u32 %v1357, 4294901760
    %v1633 = vsub.f32 %v1357, %v1632
    %1634 = vmatpush1.msra.mxu0 %v1633
    %1635 = vmatprep.subr.mxu0 0.0
    %v1636 = vand.u32 %v1358, 4294901760
    %v1637 = vsub.f32 %v1358, %v1636
    %1638 = vmatpush1.msra.mxu0 %v1637
    %1639 = vmatprep.subr.mxu0 0.0
    %v1640 = vand.u32 %v1359, 4294901760
    %v1641 = vsub.f32 %v1359, %v1640
    %1642 = vmatpush1.msra.mxu0 %v1641
    %1643 = vmatprep.subr.mxu0 0.0
    %v1644 = vand.u32 %v1360, 4294901760
    %v1645 = vsub.f32 %v1360, %v1644
    %1646 = vmatpush1.msra.mxu0 %v1645
    %1647 = vmatprep.subr.mxu0 0.0
    %v1648 = vand.u32 %v1361, 4294901760
    %v1649 = vsub.f32 %v1361, %v1648
    %1650 = vmatpush1.msra.mxu0 %v1649
    %1651 = vmatprep.subr.mxu0 0.0
    %v1652 = vand.u32 %v1362, 4294901760
    %v1653 = vsub.f32 %v1362, %v1652
    %1654 = vmatpush1.msra.mxu0 %v1653
    %1655 = vmatprep.subr.mxu0 0.0
    %v1656 = vand.u32 %v1363, 4294901760
    %v1657 = vsub.f32 %v1363, %v1656
    %1658 = vmatpush1.msra.mxu0 %v1657
    %1659 = vmatprep.subr.mxu0 0.0
    %v1660 = vand.u32 %v1364, 4294901760
    %v1661 = vsub.f32 %v1364, %v1660
    %1662 = vmatpush1.msra.mxu0 %v1661
    %1663 = vmatprep.subr.mxu0 0.0
    %v1664 = vand.u32 %v1365, 4294901760
    %v1665 = vsub.f32 %v1365, %v1664
    %1666 = vmatpush1.msra.mxu0 %v1665
    %1667 = vmatprep.subr.mxu0 0.0
    %v1668 = vand.u32 %v1366, 4294901760
    %v1669 = vsub.f32 %v1366, %v1668
    %1670 = vmatpush1.msra.mxu0 %v1669
    %1671 = vmatprep.subr.mxu0 0.0
    %v1672 = vand.u32 %v1367, 4294901760
    %v1673 = vsub.f32 %v1367, %v1672
    %1674 = vmatpush1.msra.mxu0 %v1673
    %1675 = vmatprep.subr.mxu0 0.0
    %v1676 = vand.u32 %v1368, 4294901760
    %v1677 = vsub.f32 %v1368, %v1676
    %1678 = vmatpush1.msra.mxu0 %v1677
    %1679 = vmatprep.subr.mxu0 0.0
    %1680 = vmatpush1.msra.mxu0 0.0
    %1681 = vmatprep.subr.mxu0 0.0
    %1682 = vmatpush1.msra.mxu0 0.0
    %1683 = vmatprep.subr.mxu0 0.0
    %1684 = vmatpush1.msra.mxu0 0.0
    %1685 = vmatprep.subr.mxu0 0.0
    %1686 = vmatpush1.msra.mxu0 0.0
    %1687 = vmatprep.subr.mxu0 0.0
    %1688 = vmatpush1.msra.mxu0 0.0
    %1689 = vmatprep.subr.mxu0 0.0
    %1690 = vmatpush1.msra.mxu0 0.0
    %1691 = vmatprep.subr.mxu0 0.0
    %1692 = vmatpush1.msra.mxu0 0.0
    %1693 = vmatprep.subr.mxu0 0.0
    %1694 = vmatpush1.msra.mxu0 0.0
    %1695 = vmatprep.subr.mxu0 0.0
    %1696 = vmatpush1.msra.mxu0 0.0
    %1697 = vmatprep.subr.mxu0 0.0
    %1698 = vmatpush1.msra.mxu0 0.0
    %1699 = vmatprep.subr.mxu0 0.0
    %1700 = vmatpush1.msra.mxu0 0.0
    %1701 = vmatprep.subr.mxu0 0.0
    %1702 = vmatpush1.msra.mxu0 0.0
    %1703 = vmatprep.subr.mxu0 0.0
    %1704 = vmatpush1.msra.mxu0 0.0
    %1705 = vmatprep.subr.mxu0 0.0
    %1706 = vmatpush1.msra.mxu0 0.0
    %1707 = vmatprep.subr.mxu0 0.0
    %1708 = vmatpush1.msra.mxu0 0.0
    %1709 = vmatprep.subr.mxu0 0.0
    %1710 = vmatpush1.msra.mxu0 0.0
    %1711 = vmatprep.mubr.f32.mxu0 0.0
    %v1712 = vand.u32 %v1352, 4294901760
    %v1713 = vsub.f32 %v1352, %v1712
    %1714 = vmatmul.mubr.f32.gmra.mrb[0].mxu0 %v1713
    %v1715 = vpop.f32.mrb[0].mxu0
    %v1716 = vadd.f32 %v1612, %v1715
    %v1717 = vpop.f32.mrb[0].mxu0
    %1718 = vdwg.mxu0
    %1719 = vmatprep.subr.mxu0 0.0
    %v1720 = vand.u32 %v1353, 4294901760
    %1721 = vmatpush1.msra.mxu0 %v1720
    %1722 = vmatprep.subr.mxu0 0.0
    %v1723 = vand.u32 %v1354, 4294901760
    %1724 = vmatpush1.msra.mxu0 %v1723
    %1725 = vmatprep.subr.mxu0 0.0
    %v1726 = vand.u32 %v1355, 4294901760
    %1727 = vmatpush1.msra.mxu0 %v1726
    %1728 = vmatprep.subr.mxu0 0.0
    %v1729 = vand.u32 %v1356, 4294901760
    %1730 = vmatpush1.msra.mxu0 %v1729
    %1731 = vmatprep.subr.mxu0 0.0
    %v1732 = vand.u32 %v1357, 4294901760
    %1733 = vmatpush1.msra.mxu0 %v1732
    %1734 = vmatprep.subr.mxu0 0.0
    %v1735 = vand.u32 %v1358, 4294901760
    %1736 = vmatpush1.msra.mxu0 %v1735
    %1737 = vmatprep.subr.mxu0 0.0
    %v1738 = vand.u32 %v1359, 4294901760
    %1739 = vmatpush1.msra.mxu0 %v1738
    %1740 = vmatprep.subr.mxu0 0.0
    %v1741 = vand.u32 %v1360, 4294901760
    %1742 = vmatpush1.msra.mxu0 %v1741
    %1743 = vmatprep.subr.mxu0 0.0
    %v1744 = vand.u32 %v1361, 4294901760
    %1745 = vmatpush1.msra.mxu0 %v1744
    %1746 = vmatprep.subr.mxu0 0.0
    %v1747 = vand.u32 %v1362, 4294901760
    %1748 = vmatpush1.msra.mxu0 %v1747
    %1749 = vmatprep.subr.mxu0 0.0
    %v1750 = vand.u32 %v1363, 4294901760
    %1751 = vmatpush1.msra.mxu0 %v1750
    %1752 = vmatprep.subr.mxu0 0.0
    %v1753 = vand.u32 %v1364, 4294901760
    %1754 = vmatpush1.msra.mxu0 %v1753
    %1755 = vmatprep.subr.mxu0 0.0
    %v1756 = vand.u32 %v1365, 4294901760
    %1757 = vmatpush1.msra.mxu0 %v1756
    %1758 = vmatprep.subr.mxu0 0.0
    %v1759 = vand.u32 %v1366, 4294901760
    %1760 = vmatpush1.msra.mxu0 %v1759
    %1761 = vmatprep.subr.mxu0 0.0
    %v1762 = vand.u32 %v1367, 4294901760
    %1763 = vmatpush1.msra.mxu0 %v1762
    %1764 = vmatprep.subr.mxu0 0.0
    %v1765 = vand.u32 %v1368, 4294901760
    %1766 = vmatpush1.msra.mxu0 %v1765
    %1767 = vmatprep.subr.mxu0 0.0
    %1768 = vmatpush1.msra.mxu0 0.0
    %1769 = vmatprep.subr.mxu0 0.0
    %1770 = vmatpush1.msra.mxu0 0.0
    %1771 = vmatprep.subr.mxu0 0.0
    %1772 = vmatpush1.msra.mxu0 0.0
    %1773 = vmatprep.subr.mxu0 0.0
    %1774 = vmatpush1.msra.mxu0 0.0
    %1775 = vmatprep.subr.mxu0 0.0
    %1776 = vmatpush1.msra.mxu0 0.0
    %1777 = vmatprep.subr.mxu0 0.0
    %1778 = vmatpush1.msra.mxu0 0.0
    %1779 = vmatprep.subr.mxu0 0.0
    %1780 = vmatpush1.msra.mxu0 0.0
    %1781 = vmatprep.subr.mxu0 0.0
    %1782 = vmatpush1.msra.mxu0 0.0
    %1783 = vmatprep.subr.mxu0 0.0
    %1784 = vmatpush1.msra.mxu0 0.0
    %1785 = vmatprep.subr.mxu0 0.0
    %1786 = vmatpush1.msra.mxu0 0.0
    %1787 = vmatprep.subr.mxu0 0.0
    %1788 = vmatpush1.msra.mxu0 0.0
    %1789 = vmatprep.subr.mxu0 0.0
    %1790 = vmatpush1.msra.mxu0 0.0
    %1791 = vmatprep.subr.mxu0 0.0
    %1792 = vmatpush1.msra.mxu0 0.0
    %1793 = vmatprep.subr.mxu0 0.0
    %1794 = vmatpush1.msra.mxu0 0.0
    %1795 = vmatprep.subr.mxu0 0.0
    %1796 = vmatpush1.msra.mxu0 0.0
    %1797 = vmatprep.subr.mxu0 0.0
    %1798 = vmatpush1.msra.mxu0 0.0
    %1799 = vmatprep.mubr.f32.mxu0 0.0
    %v1800 = vand.u32 %v1352, 4294901760
    %v1801 = vsub.f32 %v1352, %v1800
    %v1802 = vand.u32 %v1801, 4294901760
    %1803 = vmatmul.mubr.f32.gmra.mrb[0].mxu0 %v1802
    %v1804 = vpop.f32.mrb[0].mxu0
    %v1805 = vadd.f32 %v1716, %v1804
    %v1806 = vpop.f32.mrb[0].mxu0
    %1807 = vdwg.mxu0
    %1808 = vmatprep.subr.mxu0 0.0
    %v1809 = vand.u32 %v1353, 4294901760
    %v1810 = vsub.f32 %v1353, %v1809
    %v1811 = vand.u32 %v1810, 4294901760
    %1812 = vmatpush1.msra.mxu0 %v1811
    %1813 = vmatprep.subr.mxu0 0.0
    %v1814 = vand.u32 %v1354, 4294901760
    %v1815 = vsub.f32 %v1354, %v1814
    %v1816 = vand.u32 %v1815, 4294901760
    %1817 = vmatpush1.msra.mxu0 %v1816
    %1818 = vmatprep.subr.mxu0 0.0
    %v1819 = vand.u32 %v1355, 4294901760
    %v1820 = vsub.f32 %v1355, %v1819
    %v1821 = vand.u32 %v1820, 4294901760
    %1822 = vmatpush1.msra.mxu0 %v1821
    %1823 = vmatprep.subr.mxu0 0.0
    %v1824 = vand.u32 %v1356, 4294901760
    %v1825 = vsub.f32 %v1356, %v1824
    %v1826 = vand.u32 %v1825, 4294901760
    %1827 = vmatpush1.msra.mxu0 %v1826
    %1828 = vmatprep.subr.mxu0 0.0
    %v1829 = vand.u32 %v1357, 4294901760
    %v1830 = vsub.f32 %v1357, %v1829
    %v1831 = vand.u32 %v1830, 4294901760
    %1832 = vmatpush1.msra.mxu0 %v1831
    %1833 = vmatprep.subr.mxu0 0.0
    %v1834 = vand.u32 %v1358, 4294901760
    %v1835 = vsub.f32 %v1358, %v1834
    %v1836 = vand.u32 %v1835, 4294901760
    %1837 = vmatpush1.msra.mxu0 %v1836
    %1838 = vmatprep.subr.mxu0 0.0
    %v1839 = vand.u32 %v1359, 4294901760
    %v1840 = vsub.f32 %v1359, %v1839
    %v1841 = vand.u32 %v1840, 4294901760
    %1842 = vmatpush1.msra.mxu0 %v1841
    %1843 = vmatprep.subr.mxu0 0.0
    %v1844 = vand.u32 %v1360, 4294901760
    %v1845 = vsub.f32 %v1360, %v1844
    %v1846 = vand.u32 %v1845, 4294901760
    %1847 = vmatpush1.msra.mxu0 %v1846
    %1848 = vmatprep.subr.mxu0 0.0
    %v1849 = vand.u32 %v1361, 4294901760
    %v1850 = vsub.f32 %v1361, %v1849
    %v1851 = vand.u32 %v1850, 4294901760
    %1852 = vmatpush1.msra.mxu0 %v1851
    %1853 = vmatprep.subr.mxu0 0.0
    %v1854 = vand.u32 %v1362, 4294901760
    %v1855 = vsub.f32 %v1362, %v1854
    %v1856 = vand.u32 %v1855, 4294901760
    %1857 = vmatpush1.msra.mxu0 %v1856
    %1858 = vmatprep.subr.mxu0 0.0
    %v1859 = vand.u32 %v1363, 4294901760
    %v1860 = vsub.f32 %v1363, %v1859
    %v1861 = vand.u32 %v1860, 4294901760
    %1862 = vmatpush1.msra.mxu0 %v1861
    %1863 = vmatprep.subr.mxu0 0.0
    %v1864 = vand.u32 %v1364, 4294901760
    %v1865 = vsub.f32 %v1364, %v1864
    %v1866 = vand.u32 %v1865, 4294901760
    %1867 = vmatpush1.msra.mxu0 %v1866
    %1868 = vmatprep.subr.mxu0 0.0
    %v1869 = vand.u32 %v1365, 4294901760
    %v1870 = vsub.f32 %v1365, %v1869
    %v1871 = vand.u32 %v1870, 4294901760
    %1872 = vmatpush1.msra.mxu0 %v1871
    %1873 = vmatprep.subr.mxu0 0.0
    %v1874 = vand.u32 %v1366, 4294901760
    %v1875 = vsub.f32 %v1366, %v1874
    %v1876 = vand.u32 %v1875, 4294901760
    %1877 = vmatpush1.msra.mxu0 %v1876
    %1878 = vmatprep.subr.mxu0 0.0
    %v1879 = vand.u32 %v1367, 4294901760
    %v1880 = vsub.f32 %v1367, %v1879
    %v1881 = vand.u32 %v1880, 4294901760
    %1882 = vmatpush1.msra.mxu0 %v1881
    %1883 = vmatprep.subr.mxu0 0.0
    %v1884 = vand.u32 %v1368, 4294901760
    %v1885 = vsub.f32 %v1368, %v1884
    %v1886 = vand.u32 %v1885, 4294901760
    %1887 = vmatpush1.msra.mxu0 %v1886
    %1888 = vmatprep.subr.mxu0 0.0
    %1889 = vmatpush1.msra.mxu0 0.0
    %1890 = vmatprep.subr.mxu0 0.0
    %1891 = vmatpush1.msra.mxu0 0.0
    %1892 = vmatprep.subr.mxu0 0.0
    %1893 = vmatpush1.msra.mxu0 0.0
    %1894 = vmatprep.subr.mxu0 0.0
    %1895 = vmatpush1.msra.mxu0 0.0
    %1896 = vmatprep.subr.mxu0 0.0
    %1897 = vmatpush1.msra.mxu0 0.0
    %1898 = vmatprep.subr.mxu0 0.0
    %1899 = vmatpush1.msra.mxu0 0.0
    %1900 = vmatprep.subr.mxu0 0.0
    %1901 = vmatpush1.msra.mxu0 0.0
    %1902 = vmatprep.subr.mxu0 0.0
    %1903 = vmatpush1.msra.mxu0 0.0
    %1904 = vmatprep.subr.mxu0 0.0
    %1905 = vmatpush1.msra.mxu0 0.0
    %1906 = vmatprep.subr.mxu0 0.0
    %1907 = vmatpush1.msra.mxu0 0.0
    %1908 = vmatprep.subr.mxu0 0.0
    %1909 = vmatpush1.msra.mxu0 0.0
    %1910 = vmatprep.subr.mxu0 0.0
    %1911 = vmatpush1.msra.mxu0 0.0
    %1912 = vmatprep.subr.mxu0 0.0
    %1913 = vmatpush1.msra.mxu0 0.0
    %1914 = vmatprep.subr.mxu0 0.0
    %1915 = vmatpush1.msra.mxu0 0.0
    %1916 = vmatprep.subr.mxu0 0.0
    %1917 = vmatpush1.msra.mxu0 0.0
    %1918 = vmatprep.subr.mxu0 0.0
    %1919 = vmatpush1.msra.mxu0 0.0
    %1920 = vmatprep.mubr.f32.mxu0 0.0
    %v1921 = vand.u32 %v1352, 4294901760
    %1922 = vmatmul.mubr.f32.gmra.mrb[0].mxu0 %v1921
    %v1923 = vpop.f32.mrb[0].mxu0
    %v1924 = vadd.f32 %v1805, %v1923
    %v1925 = vpop.f32.mrb[0].mxu0
    %1926 = vdwg.mxu0
    %1927 = vmatprep.subr.mxu0 0.0
    %v1928 = vand.u32 %v1353, 4294901760
    %1929 = vmatpush1.msra.mxu0 %v1928
    %1930 = vmatprep.subr.mxu0 0.0
    %v1931 = vand.u32 %v1354, 4294901760
    %1932 = vmatpush1.msra.mxu0 %v1931
    %1933 = vmatprep.subr.mxu0 0.0
    %v1934 = vand.u32 %v1355, 4294901760
    %1935 = vmatpush1.msra.mxu0 %v1934
    %1936 = vmatprep.subr.mxu0 0.0
    %v1937 = vand.u32 %v1356, 4294901760
    %1938 = vmatpush1.msra.mxu0 %v1937
    %1939 = vmatprep.subr.mxu0 0.0
    %v1940 = vand.u32 %v1357, 4294901760
    %1941 = vmatpush1.msra.mxu0 %v1940
    %1942 = vmatprep.subr.mxu0 0.0
    %v1943 = vand.u32 %v1358, 4294901760
    %1944 = vmatpush1.msra.mxu0 %v1943
    %1945 = vmatprep.subr.mxu0 0.0
    %v1946 = vand.u32 %v1359, 4294901760
    %1947 = vmatpush1.msra.mxu0 %v1946
    %1948 = vmatprep.subr.mxu0 0.0
    %v1949 = vand.u32 %v1360, 4294901760
    %1950 = vmatpush1.msra.mxu0 %v1949
    %1951 = vmatprep.subr.mxu0 0.0
    %v1952 = vand.u32 %v1361, 4294901760
    %1953 = vmatpush1.msra.mxu0 %v1952
    %1954 = vmatprep.subr.mxu0 0.0
    %v1955 = vand.u32 %v1362, 4294901760
    %1956 = vmatpush1.msra.mxu0 %v1955
    %1957 = vmatprep.subr.mxu0 0.0
    %v1958 = vand.u32 %v1363, 4294901760
    %1959 = vmatpush1.msra.mxu0 %v1958
    %1960 = vmatprep.subr.mxu0 0.0
    %v1961 = vand.u32 %v1364, 4294901760
    %1962 = vmatpush1.msra.mxu0 %v1961
    %1963 = vmatprep.subr.mxu0 0.0
    %v1964 = vand.u32 %v1365, 4294901760
    %1965 = vmatpush1.msra.mxu0 %v1964
    %1966 = vmatprep.subr.mxu0 0.0
    %v1967 = vand.u32 %v1366, 4294901760
    %1968 = vmatpush1.msra.mxu0 %v1967
    %1969 = vmatprep.subr.mxu0 0.0
    %v1970 = vand.u32 %v1367, 4294901760
    %1971 = vmatpush1.msra.mxu0 %v1970
    %1972 = vmatprep.subr.mxu0 0.0
    %v1973 = vand.u32 %v1368, 4294901760
    %1974 = vmatpush1.msra.mxu0 %v1973
    %1975 = vmatprep.subr.mxu0 0.0
    %1976 = vmatpush1.msra.mxu0 0.0
    %1977 = vmatprep.subr.mxu0 0.0
    %1978 = vmatpush1.msra.mxu0 0.0
    %1979 = vmatprep.subr.mxu0 0.0
    %1980 = vmatpush1.msra.mxu0 0.0
    %1981 = vmatprep.subr.mxu0 0.0
    %1982 = vmatpush1.msra.mxu0 0.0
    %1983 = vmatprep.subr.mxu0 0.0
    %1984 = vmatpush1.msra.mxu0 0.0
    %1985 = vmatprep.subr.mxu0 0.0
    %1986 = vmatpush1.msra.mxu0 0.0
    %1987 = vmatprep.subr.mxu0 0.0
    %1988 = vmatpush1.msra.mxu0 0.0
    %1989 = vmatprep.subr.mxu0 0.0
    %1990 = vmatpush1.msra.mxu0 0.0
    %1991 = vmatprep.subr.mxu0 0.0
    %1992 = vmatpush1.msra.mxu0 0.0
    %1993 = vmatprep.subr.mxu0 0.0
    %1994 = vmatpush1.msra.mxu0 0.0
    %1995 = vmatprep.subr.mxu0 0.0
    %1996 = vmatpush1.msra.mxu0 0.0
    %1997 = vmatprep.subr.mxu0 0.0
    %1998 = vmatpush1.msra.mxu0 0.0
    %1999 = vmatprep.subr.mxu0 0.0
    %2000 = vmatpush1.msra.mxu0 0.0
    %2001 = vmatprep.subr.mxu0 0.0
    %2002 = vmatpush1.msra.mxu0 0.0
    %2003 = vmatprep.subr.mxu0 0.0
    %2004 = vmatpush1.msra.mxu0 0.0
    %2005 = vmatprep.subr.mxu0 0.0
    %2006 = vmatpush1.msra.mxu0 0.0
    %2007 = vmatprep.mubr.f32.mxu0 0.0
    %v2008 = vand.u32 %v1352, 4294901760
    %2009 = vmatmul.mubr.f32.gmra.mrb[0].mxu0 %v2008
    %v2010 = vpop.f32.mrb[0].mxu0
    %v2011 = vadd.f32 %v1924, %v2010
    %v2012 = vpop.f32.mrb[0].mxu0
    %2013 = vdwg.mxu0
    %v2014 = vmul.f32 %v2011, 0.2
    %v2015 = vmax.f32 %v2011, %v2014
    %v2016 = vld [vmem:[#allocation2 + $0x180] sm:$0xff]
    %v2017 = vld [vmem:[#allocation2 + $0x188] sm:$0xff]
    %v2018 = vld [vmem:[#allocation2 + $0x190] sm:$0xff]
    %v2019 = vld [vmem:[#allocation2 + $0x198] sm:$0xff]
    %v2020 = vld [vmem:[#allocation2 + $0x1a0] sm:$0xff]
    %v2021 = vld [vmem:[#allocation2 + $0x1a8] sm:$0xff]
    %v2022 = vld [vmem:[#allocation2 + $0x1b0] sm:$0xff]
    %v2023 = vld [vmem:[#allocation2 + $0x1b8] sm:$0xff]
    %v2024 = vld [vmem:[#allocation2 + $0x1c0] sm:$0xff]
    %v2025 = vld [vmem:[#allocation2 + $0x1c8] sm:$0xff]
    %v2026 = vld [vmem:[#allocation2 + $0x1d0] sm:$0xff]
    %v2027 = vld [vmem:[#allocation2 + $0x1d8] sm:$0xff]
    %v2028 = vld [vmem:[#allocation2 + $0x1e0] sm:$0xff]
    %v2029 = vld [vmem:[#allocation2 + $0x1e8] sm:$0xff]
    %v2030 = vld [vmem:[#allocation2 + $0x1f0] sm:$0xff]
    %v2031 = vld [vmem:[#allocation2 + $0x1f8] sm:$0xff]
    %v2032 = vlaneseq
    %v2033 = vshrl.u32 %v2032, 7
    %v2034 = vsub.s32 3, %v2033
    %v2035 = vrot.slane %v25, %v2034
    %2036 = vmatprep.subr.mxu0 0.0
    %v2037 = vand.u32 %v2016, 4294901760
    %2038 = vmatpush1.msra.mxu0 %v2037
    %2039 = vmatprep.subr.mxu0 0.0
    %v2040 = vand.u32 %v2017, 4294901760
    %2041 = vmatpush1.msra.mxu0 %v2040
    %2042 = vmatprep.subr.mxu0 0.0
    %v2043 = vand.u32 %v2018, 4294901760
    %2044 = vmatpush1.msra.mxu0 %v2043
    %2045 = vmatprep.subr.mxu0 0.0
    %v2046 = vand.u32 %v2019, 4294901760
    %2047 = vmatpush1.msra.mxu0 %v2046
    %2048 = vmatprep.subr.mxu0 0.0
    %v2049 = vand.u32 %v2020, 4294901760
    %2050 = vmatpush1.msra.mxu0 %v2049
    %2051 = vmatprep.subr.mxu0 0.0
    %v2052 = vand.u32 %v2021, 4294901760
    %2053 = vmatpush1.msra.mxu0 %v2052
    %2054 = vmatprep.subr.mxu0 0.0
    %v2055 = vand.u32 %v2022, 4294901760
    %2056 = vmatpush1.msra.mxu0 %v2055
    %2057 = vmatprep.subr.mxu0 0.0
    %v2058 = vand.u32 %v2023, 4294901760
    %2059 = vmatpush1.msra.mxu0 %v2058
    %2060 = vmatprep.subr.mxu0 0.0
    %v2061 = vand.u32 %v2024, 4294901760
    %2062 = vmatpush1.msra.mxu0 %v2061
    %2063 = vmatprep.subr.mxu0 0.0
    %v2064 = vand.u32 %v2025, 4294901760
    %2065 = vmatpush1.msra.mxu0 %v2064
    %2066 = vmatprep.subr.mxu0 0.0
    %v2067 = vand.u32 %v2026, 4294901760
    %2068 = vmatpush1.msra.mxu0 %v2067
    %2069 = vmatprep.subr.mxu0 0.0
    %v2070 = vand.u32 %v2027, 4294901760
    %2071 = vmatpush1.msra.mxu0 %v2070
    %2072 = vmatprep.subr.mxu0 0.0
    %v2073 = vand.u32 %v2028, 4294901760
    %2074 = vmatpush1.msra.mxu0 %v2073
    %2075 = vmatprep.subr.mxu0 0.0
    %v2076 = vand.u32 %v2029, 4294901760
    %2077 = vmatpush1.msra.mxu0 %v2076
    %2078 = vmatprep.subr.mxu0 0.0
    %v2079 = vand.u32 %v2030, 4294901760
    %2080 = vmatpush1.msra.mxu0 %v2079
    %2081 = vmatprep.subr.mxu0 0.0
    %v2082 = vand.u32 %v2031, 4294901760
    %2083 = vmatpush1.msra.mxu0 %v2082
    %2084 = vmatprep.subr.mxu0 0.0
    %2085 = vmatpush1.msra.mxu0 0.0
    %2086 = vmatprep.subr.mxu0 0.0
    %2087 = vmatpush1.msra.mxu0 0.0
    %2088 = vmatprep.subr.mxu0 0.0
    %2089 = vmatpush1.msra.mxu0 0.0
    %2090 = vmatprep.subr.mxu0 0.0
    %2091 = vmatpush1.msra.mxu0 0.0
    %2092 = vmatprep.subr.mxu0 0.0
    %2093 = vmatpush1.msra.mxu0 0.0
    %2094 = vmatprep.subr.mxu0 0.0
    %2095 = vmatpush1.msra.mxu0 0.0
    %2096 = vmatprep.subr.mxu0 0.0
    %2097 = vmatpush1.msra.mxu0 0.0
    %2098 = vmatprep.subr.mxu0 0.0
    %2099 = vmatpush1.msra.mxu0 0.0
    %2100 = vmatprep.subr.mxu0 0.0
    %2101 = vmatpush1.msra.mxu0 0.0
    %2102 = vmatprep.subr.mxu0 0.0
    %2103 = vmatpush1.msra.mxu0 0.0
    %2104 = vmatprep.subr.mxu0 0.0
    %2105 = vmatpush1.msra.mxu0 0.0
    %2106 = vmatprep.subr.mxu0 0.0
    %2107 = vmatpush1.msra.mxu0 0.0
    %2108 = vmatprep.subr.mxu0 0.0
    %2109 = vmatpush1.msra.mxu0 0.0
    %2110 = vmatprep.subr.mxu0 0.0
    %2111 = vmatpush1.msra.mxu0 0.0
    %2112 = vmatprep.subr.mxu0 0.0
    %2113 = vmatpush1.msra.mxu0 0.0
    %2114 = vmatprep.subr.mxu0 0.0
    %2115 = vmatpush1.msra.mxu0 0.0
    %2116 = vmatprep.mubr.f32.mxu0 0.0
    %v2117 = vand.u32 %v2015, 4294901760
    %v2118 = vsub.f32 %v2015, %v2117
    %v2119 = vand.u32 %v2118, 4294901760
    %v2120 = vsub.f32 %v2118, %v2119
    %v2121 = vand.u32 %v2120, 4294901760
    %2122 = vmatmul.mubr.f32.gmra.mrb[0].mxu0 %v2121
    %v2123 = vpop.f32.mrb[0].mxu0
    %v2124 = vadd.f32 %v2035, %v2123
    %v2125 = vpop.f32.mrb[0].mxu0
    %2126 = vdwg.mxu0
    %2127 = vmatprep.subr.mxu0 0.0
    %v2128 = vand.u32 %v2016, 4294901760
    %v2129 = vsub.f32 %v2016, %v2128
    %v2130 = vand.u32 %v2129, 4294901760
    %v2131 = vsub.f32 %v2129, %v2130
    %v2132 = vand.u32 %v2131, 4294901760
    %2133 = vmatpush1.msra.mxu0 %v2132
    %2134 = vmatprep.subr.mxu0 0.0
    %v2135 = vand.u32 %v2017, 4294901760
    %v2136 = vsub.f32 %v2017, %v2135
    %v2137 = vand.u32 %v2136, 4294901760
    %v2138 = vsub.f32 %v2136, %v2137
    %v2139 = vand.u32 %v2138, 4294901760
    %2140 = vmatpush1.msra.mxu0 %v2139
    %2141 = vmatprep.subr.mxu0 0.0
    %v2142 = vand.u32 %v2018, 4294901760
    %v2143 = vsub.f32 %v2018, %v2142
    %v2144 = vand.u32 %v2143, 4294901760
    %v2145 = vsub.f32 %v2143, %v2144
    %v2146 = vand.u32 %v2145, 4294901760
    %2147 = vmatpush1.msra.mxu0 %v2146
    %2148 = vmatprep.subr.mxu0 0.0
    %v2149 = vand.u32 %v2019, 4294901760
    %v2150 = vsub.f32 %v2019, %v2149
    %v2151 = vand.u32 %v2150, 4294901760
    %v2152 = vsub.f32 %v2150, %v2151
    %v2153 = vand.u32 %v2152, 4294901760
    %2154 = vmatpush1.msra.mxu0 %v2153
    %2155 = vmatprep.subr.mxu0 0.0
    %v2156 = vand.u32 %v2020, 4294901760
    %v2157 = vsub.f32 %v2020, %v2156
    %v2158 = vand.u32 %v2157, 4294901760
    %v2159 = vsub.f32 %v2157, %v2158
    %v2160 = vand.u32 %v2159, 4294901760
    %2161 = vmatpush1.msra.mxu0 %v2160
    %2162 = vmatprep.subr.mxu0 0.0
    %v2163 = vand.u32 %v2021, 4294901760
    %v2164 = vsub.f32 %v2021, %v2163
    %v2165 = vand.u32 %v2164, 4294901760
    %v2166 = vsub.f32 %v2164, %v2165
    %v2167 = vand.u32 %v2166, 4294901760
    %2168 = vmatpush1.msra.mxu0 %v2167
    %2169 = vmatprep.subr.mxu0 0.0
    %v2170 = vand.u32 %v2022, 4294901760
    %v2171 = vsub.f32 %v2022, %v2170
    %v2172 = vand.u32 %v2171, 4294901760
    %v2173 = vsub.f32 %v2171, %v2172
    %v2174 = vand.u32 %v2173, 4294901760
    %2175 = vmatpush1.msra.mxu0 %v2174
    %2176 = vmatprep.subr.mxu0 0.0
    %v2177 = vand.u32 %v2023, 4294901760
    %v2178 = vsub.f32 %v2023, %v2177
    %v2179 = vand.u32 %v2178, 4294901760
    %v2180 = vsub.f32 %v2178, %v2179
    %v2181 = vand.u32 %v2180, 4294901760
    %2182 = vmatpush1.msra.mxu0 %v2181
    %2183 = vmatprep.subr.mxu0 0.0
    %v2184 = vand.u32 %v2024, 4294901760
    %v2185 = vsub.f32 %v2024, %v2184
    %v2186 = vand.u32 %v2185, 4294901760
    %v2187 = vsub.f32 %v2185, %v2186
    %v2188 = vand.u32 %v2187, 4294901760
    %2189 = vmatpush1.msra.mxu0 %v2188
    %2190 = vmatprep.subr.mxu0 0.0
    %v2191 = vand.u32 %v2025, 4294901760
    %v2192 = vsub.f32 %v2025, %v2191
    %v2193 = vand.u32 %v2192, 4294901760
    %v2194 = vsub.f32 %v2192, %v2193
    %v2195 = vand.u32 %v2194, 4294901760
    %2196 = vmatpush1.msra.mxu0 %v2195
    %2197 = vmatprep.subr.mxu0 0.0
    %v2198 = vand.u32 %v2026, 4294901760
    %v2199 = vsub.f32 %v2026, %v2198
    %v2200 = vand.u32 %v2199, 4294901760
    %v2201 = vsub.f32 %v2199, %v2200
    %v2202 = vand.u32 %v2201, 4294901760
    %2203 = vmatpush1.msra.mxu0 %v2202
    %2204 = vmatprep.subr.mxu0 0.0
    %v2205 = vand.u32 %v2027, 4294901760
    %v2206 = vsub.f32 %v2027, %v2205
    %v2207 = vand.u32 %v2206, 4294901760
    %v2208 = vsub.f32 %v2206, %v2207
    %v2209 = vand.u32 %v2208, 4294901760
    %2210 = vmatpush1.msra.mxu0 %v2209
    %2211 = vmatprep.subr.mxu0 0.0
    %v2212 = vand.u32 %v2028, 4294901760
    %v2213 = vsub.f32 %v2028, %v2212
    %v2214 = vand.u32 %v2213, 4294901760
    %v2215 = vsub.f32 %v2213, %v2214
    %v2216 = vand.u32 %v2215, 4294901760
    %2217 = vmatpush1.msra.mxu0 %v2216
    %2218 = vmatprep.subr.mxu0 0.0
    %v2219 = vand.u32 %v2029, 4294901760
    %v2220 = vsub.f32 %v2029, %v2219
    %v2221 = vand.u32 %v2220, 4294901760
    %v2222 = vsub.f32 %v2220, %v2221
    %v2223 = vand.u32 %v2222, 4294901760
    %2224 = vmatpush1.msra.mxu0 %v2223
    %2225 = vmatprep.subr.mxu0 0.0
    %v2226 = vand.u32 %v2030, 4294901760
    %v2227 = vsub.f32 %v2030, %v2226
    %v2228 = vand.u32 %v2227, 4294901760
    %v2229 = vsub.f32 %v2227, %v2228
    %v2230 = vand.u32 %v2229, 4294901760
    %2231 = vmatpush1.msra.mxu0 %v2230
    %2232 = vmatprep.subr.mxu0 0.0
    %v2233 = vand.u32 %v2031, 4294901760
    %v2234 = vsub.f32 %v2031, %v2233
    %v2235 = vand.u32 %v2234, 4294901760
    %v2236 = vsub.f32 %v2234, %v2235
    %v2237 = vand.u32 %v2236, 4294901760
    %2238 = vmatpush1.msra.mxu0 %v2237
    %2239 = vmatprep.subr.mxu0 0.0
    %2240 = vmatpush1.msra.mxu0 0.0
    %2241 = vmatprep.subr.mxu0 0.0
    %2242 = vmatpush1.msra.mxu0 0.0
    %2243 = vmatprep.subr.mxu0 0.0
    %2244 = vmatpush1.msra.mxu0 0.0
    %2245 = vmatprep.subr.mxu0 0.0
    %2246 = vmatpush1.msra.mxu0 0.0
    %2247 = vmatprep.subr.mxu0 0.0
    %2248 = vmatpush1.msra.mxu0 0.0
    %2249 = vmatprep.subr.mxu0 0.0
    %2250 = vmatpush1.msra.mxu0 0.0
    %2251 = vmatprep.subr.mxu0 0.0
    %2252 = vmatpush1.msra.mxu0 0.0
    %2253 = vmatprep.subr.mxu0 0.0
    %2254 = vmatpush1.msra.mxu0 0.0
    %2255 = vmatprep.subr.mxu0 0.0
    %2256 = vmatpush1.msra.mxu0 0.0
    %2257 = vmatprep.subr.mxu0 0.0
    %2258 = vmatpush1.msra.mxu0 0.0
    %2259 = vmatprep.subr.mxu0 0.0
    %2260 = vmatpush1.msra.mxu0 0.0
    %2261 = vmatprep.subr.mxu0 0.0
    %2262 = vmatpush1.msra.mxu0 0.0
    %2263 = vmatprep.subr.mxu0 0.0
    %2264 = vmatpush1.msra.mxu0 0.0
    %2265 = vmatprep.subr.mxu0 0.0
    %2266 = vmatpush1.msra.mxu0 0.0
    %2267 = vmatprep.subr.mxu0 0.0
    %2268 = vmatpush1.msra.mxu0 0.0
    %2269 = vmatprep.subr.mxu0 0.0
    %2270 = vmatpush1.msra.mxu0 0.0
    %2271 = vmatprep.mubr.f32.mxu0 0.0
    %v2272 = vand.u32 %v2015, 4294901760
    %2273 = vmatmul.mubr.f32.gmra.mrb[0].mxu0 %v2272
    %v2274 = vpop.f32.mrb[0].mxu0
    %v2275 = vadd.f32 %v2124, %v2274
    %v2276 = vpop.f32.mrb[0].mxu0
    %2277 = vdwg.mxu0
    %2278 = vmatprep.subr.mxu0 0.0
    %v2279 = vand.u32 %v2016, 4294901760
    %v2280 = vsub.f32 %v2016, %v2279
    %2281 = vmatpush1.msra.mxu0 %v2280
    %2282 = vmatprep.subr.mxu0 0.0
    %v2283 = vand.u32 %v2017, 4294901760
    %v2284 = vsub.f32 %v2017, %v2283
    %2285 = vmatpush1.msra.mxu0 %v2284
    %2286 = vmatprep.subr.mxu0 0.0
    %v2287 = vand.u32 %v2018, 4294901760
    %v2288 = vsub.f32 %v2018, %v2287
    %2289 = vmatpush1.msra.mxu0 %v2288
    %2290 = vmatprep.subr.mxu0 0.0
    %v2291 = vand.u32 %v2019, 4294901760
    %v2292 = vsub.f32 %v2019, %v2291
    %2293 = vmatpush1.msra.mxu0 %v2292
    %2294 = vmatprep.subr.mxu0 0.0
    %v2295 = vand.u32 %v2020, 4294901760
    %v2296 = vsub.f32 %v2020, %v2295
    %2297 = vmatpush1.msra.mxu0 %v2296
    %2298 = vmatprep.subr.mxu0 0.0
    %v2299 = vand.u32 %v2021, 4294901760
    %v2300 = vsub.f32 %v2021, %v2299
    %2301 = vmatpush1.msra.mxu0 %v2300
    %2302 = vmatprep.subr.mxu0 0.0
    %v2303 = vand.u32 %v2022, 4294901760
    %v2304 = vsub.f32 %v2022, %v2303
    %2305 = vmatpush1.msra.mxu0 %v2304
    %2306 = vmatprep.subr.mxu0 0.0
    %v2307 = vand.u32 %v2023, 4294901760
    %v2308 = vsub.f32 %v2023, %v2307
    %2309 = vmatpush1.msra.mxu0 %v2308
    %2310 = vmatprep.subr.mxu0 0.0
    %v2311 = vand.u32 %v2024, 4294901760
    %v2312 = vsub.f32 %v2024, %v2311
    %2313 = vmatpush1.msra.mxu0 %v2312
    %2314 = vmatprep.subr.mxu0 0.0
    %v2315 = vand.u32 %v2025, 4294901760
    %v2316 = vsub.f32 %v2025, %v2315
    %2317 = vmatpush1.msra.mxu0 %v2316
    %2318 = vmatprep.subr.mxu0 0.0
    %v2319 = vand.u32 %v2026, 4294901760
    %v2320 = vsub.f32 %v2026, %v2319
    %2321 = vmatpush1.msra.mxu0 %v2320
    %2322 = vmatprep.subr.mxu0 0.0
    %v2323 = vand.u32 %v2027, 4294901760
    %v2324 = vsub.f32 %v2027, %v2323
    %2325 = vmatpush1.msra.mxu0 %v2324
    %2326 = vmatprep.subr.mxu0 0.0
    %v2327 = vand.u32 %v2028, 4294901760
    %v2328 = vsub.f32 %v2028, %v2327
    %2329 = vmatpush1.msra.mxu0 %v2328
    %2330 = vmatprep.subr.mxu0 0.0
    %v2331 = vand.u32 %v2029, 4294901760
    %v2332 = vsub.f32 %v2029, %v2331
    %2333 = vmatpush1.msra.mxu0 %v2332
    %2334 = vmatprep.subr.mxu0 0.0
    %v2335 = vand.u32 %v2030, 4294901760
    %v2336 = vsub.f32 %v2030, %v2335
    %2337 = vmatpush1.msra.mxu0 %v2336
    %2338 = vmatprep.subr.mxu0 0.0
    %v2339 = vand.u32 %v2031, 4294901760
    %v2340 = vsub.f32 %v2031, %v2339
    %2341 = vmatpush1.msra.mxu0 %v2340
    %2342 = vmatprep.subr.mxu0 0.0
    %2343 = vmatpush1.msra.mxu0 0.0
    %2344 = vmatprep.subr.mxu0 0.0
    %2345 = vmatpush1.msra.mxu0 0.0
    %2346 = vmatprep.subr.mxu0 0.0
    %2347 = vmatpush1.msra.mxu0 0.0
    %2348 = vmatprep.subr.mxu0 0.0
    %2349 = vmatpush1.msra.mxu0 0.0
    %2350 = vmatprep.subr.mxu0 0.0
    %2351 = vmatpush1.msra.mxu0 0.0
    %2352 = vmatprep.subr.mxu0 0.0
    %2353 = vmatpush1.msra.mxu0 0.0
    %2354 = vmatprep.subr.mxu0 0.0
    %2355 = vmatpush1.msra.mxu0 0.0
    %2356 = vmatprep.subr.mxu0 0.0
    %2357 = vmatpush1.msra.mxu0 0.0
    %2358 = vmatprep.subr.mxu0 0.0
    %2359 = vmatpush1.msra.mxu0 0.0
    %2360 = vmatprep.subr.mxu0 0.0
    %2361 = vmatpush1.msra.mxu0 0.0
    %2362 = vmatprep.subr.mxu0 0.0
    %2363 = vmatpush1.msra.mxu0 0.0
    %2364 = vmatprep.subr.mxu0 0.0
    %2365 = vmatpush1.msra.mxu0 0.0
    %2366 = vmatprep.subr.mxu0 0.0
    %2367 = vmatpush1.msra.mxu0 0.0
    %2368 = vmatprep.subr.mxu0 0.0
    %2369 = vmatpush1.msra.mxu0 0.0
    %2370 = vmatprep.subr.mxu0 0.0
    %2371 = vmatpush1.msra.mxu0 0.0
    %2372 = vmatprep.subr.mxu0 0.0
    %2373 = vmatpush1.msra.mxu0 0.0
    %2374 = vmatprep.mubr.f32.mxu0 0.0
    %v2375 = vand.u32 %v2015, 4294901760
    %v2376 = vsub.f32 %v2015, %v2375
    %2377 = vmatmul.mubr.f32.gmra.mrb[0].mxu0 %v2376
    %v2378 = vpop.f32.mrb[0].mxu0
    %v2379 = vadd.f32 %v2275, %v2378
    %v2380 = vpop.f32.mrb[0].mxu0
    %2381 = vdwg.mxu0
    %2382 = vmatprep.subr.mxu0 0.0
    %v2383 = vand.u32 %v2016, 4294901760
    %2384 = vmatpush1.msra.mxu0 %v2383
    %2385 = vmatprep.subr.mxu0 0.0
    %v2386 = vand.u32 %v2017, 4294901760
    %2387 = vmatpush1.msra.mxu0 %v2386
    %2388 = vmatprep.subr.mxu0 0.0
    %v2389 = vand.u32 %v2018, 4294901760
    %2390 = vmatpush1.msra.mxu0 %v2389
    %2391 = vmatprep.subr.mxu0 0.0
    %v2392 = vand.u32 %v2019, 4294901760
    %2393 = vmatpush1.msra.mxu0 %v2392
    %2394 = vmatprep.subr.mxu0 0.0
    %v2395 = vand.u32 %v2020, 4294901760
    %2396 = vmatpush1.msra.mxu0 %v2395
    %2397 = vmatprep.subr.mxu0 0.0
    %v2398 = vand.u32 %v2021, 4294901760
    %2399 = vmatpush1.msra.mxu0 %v2398
    %2400 = vmatprep.subr.mxu0 0.0
    %v2401 = vand.u32 %v2022, 4294901760
    %2402 = vmatpush1.msra.mxu0 %v2401
    %2403 = vmatprep.subr.mxu0 0.0
    %v2404 = vand.u32 %v2023, 4294901760
    %2405 = vmatpush1.msra.mxu0 %v2404
    %2406 = vmatprep.subr.mxu0 0.0
    %v2407 = vand.u32 %v2024, 4294901760
    %2408 = vmatpush1.msra.mxu0 %v2407
    %2409 = vmatprep.subr.mxu0 0.0
    %v2410 = vand.u32 %v2025, 4294901760
    %2411 = vmatpush1.msra.mxu0 %v2410
    %2412 = vmatprep.subr.mxu0 0.0
    %v2413 = vand.u32 %v2026, 4294901760
    %2414 = vmatpush1.msra.mxu0 %v2413
    %2415 = vmatprep.subr.mxu0 0.0
    %v2416 = vand.u32 %v2027, 4294901760
    %2417 = vmatpush1.msra.mxu0 %v2416
    %2418 = vmatprep.subr.mxu0 0.0
    %v2419 = vand.u32 %v2028, 4294901760
    %2420 = vmatpush1.msra.mxu0 %v2419
    %2421 = vmatprep.subr.mxu0 0.0
    %v2422 = vand.u32 %v2029, 4294901760
    %2423 = vmatpush1.msra.mxu0 %v2422
    %2424 = vmatprep.subr.mxu0 0.0
    %v2425 = vand.u32 %v2030, 4294901760
    %2426 = vmatpush1.msra.mxu0 %v2425
    %2427 = vmatprep.subr.mxu0 0.0
    %v2428 = vand.u32 %v2031, 4294901760
    %2429 = vmatpush1.msra.mxu0 %v2428
    %2430 = vmatprep.subr.mxu0 0.0
    %2431 = vmatpush1.msra.mxu0 0.0
    %2432 = vmatprep.subr.mxu0 0.0
    %2433 = vmatpush1.msra.mxu0 0.0
    %2434 = vmatprep.subr.mxu0 0.0
    %2435 = vmatpush1.msra.mxu0 0.0
    %2436 = vmatprep.subr.mxu0 0.0
    %2437 = vmatpush1.msra.mxu0 0.0
    %2438 = vmatprep.subr.mxu0 0.0
    %2439 = vmatpush1.msra.mxu0 0.0
    %2440 = vmatprep.subr.mxu0 0.0
    %2441 = vmatpush1.msra.mxu0 0.0
    %2442 = vmatprep.subr.mxu0 0.0
    %2443 = vmatpush1.msra.mxu0 0.0
    %2444 = vmatprep.subr.mxu0 0.0
    %2445 = vmatpush1.msra.mxu0 0.0
    %2446 = vmatprep.subr.mxu0 0.0
    %2447 = vmatpush1.msra.mxu0 0.0
    %2448 = vmatprep.subr.mxu0 0.0
    %2449 = vmatpush1.msra.mxu0 0.0
    %2450 = vmatprep.subr.mxu0 0.0
    %2451 = vmatpush1.msra.mxu0 0.0
    %2452 = vmatprep.subr.mxu0 0.0
    %2453 = vmatpush1.msra.mxu0 0.0
    %2454 = vmatprep.subr.mxu0 0.0
    %2455 = vmatpush1.msra.mxu0 0.0
    %2456 = vmatprep.subr.mxu0 0.0
    %2457 = vmatpush1.msra.mxu0 0.0
    %2458 = vmatprep.subr.mxu0 0.0
    %2459 = vmatpush1.msra.mxu0 0.0
    %2460 = vmatprep.subr.mxu0 0.0
    %2461 = vmatpush1.msra.mxu0 0.0
    %2462 = vmatprep.mubr.f32.mxu0 0.0
    %v2463 = vand.u32 %v2015, 4294901760
    %v2464 = vsub.f32 %v2015, %v2463
    %v2465 = vand.u32 %v2464, 4294901760
    %2466 = vmatmul.mubr.f32.gmra.mrb[0].mxu0 %v2465
    %v2467 = vpop.f32.mrb[0].mxu0
    %v2468 = vadd.f32 %v2379, %v2467
    %v2469 = vpop.f32.mrb[0].mxu0
    %2470 = vdwg.mxu0
    %2471 = vmatprep.subr.mxu0 0.0
    %v2472 = vand.u32 %v2016, 4294901760
    %v2473 = vsub.f32 %v2016, %v2472
    %v2474 = vand.u32 %v2473, 4294901760
    %2475 = vmatpush1.msra.mxu0 %v2474
    %2476 = vmatprep.subr.mxu0 0.0
    %v2477 = vand.u32 %v2017, 4294901760
    %v2478 = vsub.f32 %v2017, %v2477
    %v2479 = vand.u32 %v2478, 4294901760
    %2480 = vmatpush1.msra.mxu0 %v2479
    %2481 = vmatprep.subr.mxu0 0.0
    %v2482 = vand.u32 %v2018, 4294901760
    %v2483 = vsub.f32 %v2018, %v2482
    %v2484 = vand.u32 %v2483, 4294901760
    %2485 = vmatpush1.msra.mxu0 %v2484
    %2486 = vmatprep.subr.mxu0 0.0
    %v2487 = vand.u32 %v2019, 4294901760
    %v2488 = vsub.f32 %v2019, %v2487
    %v2489 = vand.u32 %v2488, 4294901760
    %2490 = vmatpush1.msra.mxu0 %v2489
    %2491 = vmatprep.subr.mxu0 0.0
    %v2492 = vand.u32 %v2020, 4294901760
    %v2493 = vsub.f32 %v2020, %v2492
    %v2494 = vand.u32 %v2493, 4294901760
    %2495 = vmatpush1.msra.mxu0 %v2494
    %2496 = vmatprep.subr.mxu0 0.0
    %v2497 = vand.u32 %v2021, 4294901760
    %v2498 = vsub.f32 %v2021, %v2497
    %v2499 = vand.u32 %v2498, 4294901760
    %2500 = vmatpush1.msra.mxu0 %v2499
    %2501 = vmatprep.subr.mxu0 0.0
    %v2502 = vand.u32 %v2022, 4294901760
    %v2503 = vsub.f32 %v2022, %v2502
    %v2504 = vand.u32 %v2503, 4294901760
    %2505 = vmatpush1.msra.mxu0 %v2504
    %2506 = vmatprep.subr.mxu0 0.0
    %v2507 = vand.u32 %v2023, 4294901760
    %v2508 = vsub.f32 %v2023, %v2507
    %v2509 = vand.u32 %v2508, 4294901760
    %2510 = vmatpush1.msra.mxu0 %v2509
    %2511 = vmatprep.subr.mxu0 0.0
    %v2512 = vand.u32 %v2024, 4294901760
    %v2513 = vsub.f32 %v2024, %v2512
    %v2514 = vand.u32 %v2513, 4294901760
    %2515 = vmatpush1.msra.mxu0 %v2514
    %2516 = vmatprep.subr.mxu0 0.0
    %v2517 = vand.u32 %v2025, 4294901760
    %v2518 = vsub.f32 %v2025, %v2517
    %v2519 = vand.u32 %v2518, 4294901760
    %2520 = vmatpush1.msra.mxu0 %v2519
    %2521 = vmatprep.subr.mxu0 0.0
    %v2522 = vand.u32 %v2026, 4294901760
    %v2523 = vsub.f32 %v2026, %v2522
    %v2524 = vand.u32 %v2523, 4294901760
    %2525 = vmatpush1.msra.mxu0 %v2524
    %2526 = vmatprep.subr.mxu0 0.0
    %v2527 = vand.u32 %v2027, 4294901760
    %v2528 = vsub.f32 %v2027, %v2527
    %v2529 = vand.u32 %v2528, 4294901760
    %2530 = vmatpush1.msra.mxu0 %v2529
    %2531 = vmatprep.subr.mxu0 0.0
    %v2532 = vand.u32 %v2028, 4294901760
    %v2533 = vsub.f32 %v2028, %v2532
    %v2534 = vand.u32 %v2533, 4294901760
    %2535 = vmatpush1.msra.mxu0 %v2534
    %2536 = vmatprep.subr.mxu0 0.0
    %v2537 = vand.u32 %v2029, 4294901760
    %v2538 = vsub.f32 %v2029, %v2537
    %v2539 = vand.u32 %v2538, 4294901760
    %2540 = vmatpush1.msra.mxu0 %v2539
    %2541 = vmatprep.subr.mxu0 0.0
    %v2542 = vand.u32 %v2030, 4294901760
    %v2543 = vsub.f32 %v2030, %v2542
    %v2544 = vand.u32 %v2543, 4294901760
    %2545 = vmatpush1.msra.mxu0 %v2544
    %2546 = vmatprep.subr.mxu0 0.0
    %v2547 = vand.u32 %v2031, 4294901760
    %v2548 = vsub.f32 %v2031, %v2547
    %v2549 = vand.u32 %v2548, 4294901760
    %2550 = vmatpush1.msra.mxu0 %v2549
    %2551 = vmatprep.subr.mxu0 0.0
    %2552 = vmatpush1.msra.mxu0 0.0
    %2553 = vmatprep.subr.mxu0 0.0
    %2554 = vmatpush1.msra.mxu0 0.0
    %2555 = vmatprep.subr.mxu0 0.0
    %2556 = vmatpush1.msra.mxu0 0.0
    %2557 = vmatprep.subr.mxu0 0.0
    %2558 = vmatpush1.msra.mxu0 0.0
    %2559 = vmatprep.subr.mxu0 0.0
    %2560 = vmatpush1.msra.mxu0 0.0
    %2561 = vmatprep.subr.mxu0 0.0
    %2562 = vmatpush1.msra.mxu0 0.0
    %2563 = vmatprep.subr.mxu0 0.0
    %2564 = vmatpush1.msra.mxu0 0.0
    %2565 = vmatprep.subr.mxu0 0.0
    %2566 = vmatpush1.msra.mxu0 0.0
    %2567 = vmatprep.subr.mxu0 0.0
    %2568 = vmatpush1.msra.mxu0 0.0
    %2569 = vmatprep.subr.mxu0 0.0
    %2570 = vmatpush1.msra.mxu0 0.0
    %2571 = vmatprep.subr.mxu0 0.0
    %2572 = vmatpush1.msra.mxu0 0.0
    %2573 = vmatprep.subr.mxu0 0.0
    %2574 = vmatpush1.msra.mxu0 0.0
    %2575 = vmatprep.subr.mxu0 0.0
    %2576 = vmatpush1.msra.mxu0 0.0
    %2577 = vmatprep.subr.mxu0 0.0
    %2578 = vmatpush1.msra.mxu0 0.0
    %2579 = vmatprep.subr.mxu0 0.0
    %2580 = vmatpush1.msra.mxu0 0.0
    %2581 = vmatprep.subr.mxu0 0.0
    %2582 = vmatpush1.msra.mxu0 0.0
    %2583 = vmatprep.mubr.f32.mxu0 0.0
    %v2584 = vand.u32 %v2015, 4294901760
    %2585 = vmatmul.mubr.f32.gmra.mrb[0].mxu0 %v2584
    %v2586 = vpop.f32.mrb[0].mxu0
    %v2587 = vadd.f32 %v2468, %v2586
    %v2588 = vpop.f32.mrb[0].mxu0
    %2589 = vdwg.mxu0
    %2590 = vmatprep.subr.mxu0 0.0
    %v2591 = vand.u32 %v2016, 4294901760
    %2592 = vmatpush1.msra.mxu0 %v2591
    %2593 = vmatprep.subr.mxu0 0.0
    %v2594 = vand.u32 %v2017, 4294901760
    %2595 = vmatpush1.msra.mxu0 %v2594
    %2596 = vmatprep.subr.mxu0 0.0
    %v2597 = vand.u32 %v2018, 4294901760
    %2598 = vmatpush1.msra.mxu0 %v2597
    %2599 = vmatprep.subr.mxu0 0.0
    %v2600 = vand.u32 %v2019, 4294901760
    %2601 = vmatpush1.msra.mxu0 %v2600
    %2602 = vmatprep.subr.mxu0 0.0
    %v2603 = vand.u32 %v2020, 4294901760
    %2604 = vmatpush1.msra.mxu0 %v2603
    %2605 = vmatprep.subr.mxu0 0.0
    %v2606 = vand.u32 %v2021, 4294901760
    %2607 = vmatpush1.msra.mxu0 %v2606
    %2608 = vmatprep.subr.mxu0 0.0
    %v2609 = vand.u32 %v2022, 4294901760
    %2610 = vmatpush1.msra.mxu0 %v2609
    %2611 = vmatprep.subr.mxu0 0.0
    %v2612 = vand.u32 %v2023, 4294901760
    %2613 = vmatpush1.msra.mxu0 %v2612
    %2614 = vmatprep.subr.mxu0 0.0
    %v2615 = vand.u32 %v2024, 4294901760
    %2616 = vmatpush1.msra.mxu0 %v2615
    %2617 = vmatprep.subr.mxu0 0.0
    %v2618 = vand.u32 %v2025, 4294901760
    %2619 = vmatpush1.msra.mxu0 %v2618
    %2620 = vmatprep.subr.mxu0 0.0
    %v2621 = vand.u32 %v2026, 4294901760
    %2622 = vmatpush1.msra.mxu0 %v2621
    %2623 = vmatprep.subr.mxu0 0.0
    %v2624 = vand.u32 %v2027, 4294901760
    %2625 = vmatpush1.msra.mxu0 %v2624
    %2626 = vmatprep.subr.mxu0 0.0
    %v2627 = vand.u32 %v2028, 4294901760
    %2628 = vmatpush1.msra.mxu0 %v2627
    %2629 = vmatprep.subr.mxu0 0.0
    %v2630 = vand.u32 %v2029, 4294901760
    %2631 = vmatpush1.msra.mxu0 %v2630
    %2632 = vmatprep.subr.mxu0 0.0
    %v2633 = vand.u32 %v2030, 4294901760
    %2634 = vmatpush1.msra.mxu0 %v2633
    %2635 = vmatprep.subr.mxu0 0.0
    %v2636 = vand.u32 %v2031, 4294901760
    %2637 = vmatpush1.msra.mxu0 %v2636
    %2638 = vmatprep.subr.mxu0 0.0
    %2639 = vmatpush1.msra.mxu0 0.0
    %2640 = vmatprep.subr.mxu0 0.0
    %2641 = vmatpush1.msra.mxu0 0.0
    %2642 = vmatprep.subr.mxu0 0.0
    %2643 = vmatpush1.msra.mxu0 0.0
    %2644 = vmatprep.subr.mxu0 0.0
    %2645 = vmatpush1.msra.mxu0 0.0
    %2646 = vmatprep.subr.mxu0 0.0
    %2647 = vmatpush1.msra.mxu0 0.0
    %2648 = vmatprep.subr.mxu0 0.0
    %2649 = vmatpush1.msra.mxu0 0.0
    %2650 = vmatprep.subr.mxu0 0.0
    %2651 = vmatpush1.msra.mxu0 0.0
    %2652 = vmatprep.subr.mxu0 0.0
    %2653 = vmatpush1.msra.mxu0 0.0
    %2654 = vmatprep.subr.mxu0 0.0
    %2655 = vmatpush1.msra.mxu0 0.0
    %2656 = vmatprep.subr.mxu0 0.0
    %2657 = vmatpush1.msra.mxu0 0.0
    %2658 = vmatprep.subr.mxu0 0.0
    %2659 = vmatpush1.msra.mxu0 0.0
    %2660 = vmatprep.subr.mxu0 0.0
    %2661 = vmatpush1.msra.mxu0 0.0
    %2662 = vmatprep.subr.mxu0 0.0
    %2663 = vmatpush1.msra.mxu0 0.0
    %2664 = vmatprep.subr.mxu0 0.0
    %2665 = vmatpush1.msra.mxu0 0.0
    %2666 = vmatprep.subr.mxu0 0.0
    %2667 = vmatpush1.msra.mxu0 0.0
    %2668 = vmatprep.subr.mxu0 0.0
    %2669 = vmatpush1.msra.mxu0 0.0
    %2670 = vmatprep.mubr.f32.mxu0 0.0
    %v2671 = vand.u32 %v2015, 4294901760
    %2672 = vmatmul.mubr.f32.gmra.mrb[0].mxu0 %v2671
    %v2673 = vpop.f32.mrb[0].mxu0
    %v2674 = vadd.f32 %v2587, %v2673
    %v2675 = vpop.f32.mrb[0].mxu0
    %2676 = vdwg.mxu0
    %v2677 = vlaneseq
    %v2678 = vand.u32 %v2677, 127
    %vm2679 = vcmp.lt.s32.totalorder %v2678, 16
    %v2680 = vsel %vm2679, %v2674, -1e+30
    %2681 = vmax.xlane.f32.xlu0 %v2680
    %v2682 = vpop.xlane.xlu0 %2681
    %v2683 = vsub.f32 %v2680, %v2682
    %v2684 = vmul.f32 %v2683, 1.442695
    %v2685 = vpow.pop %v2684
    %2686 = vadd.xlane.f32.xlu0 %v2685
    %v2687 = vpop.xlane.xlu0 %2686
    %v2688 = vrcp.pop %v2687
    %v2689 = vmul.f32 %v2687, %v2688
    %v2690 = vsub.f32 2.0, %v2689
    %v2691 = vmul.f32 %v2688, %v2690
    %vm2692 = vcmp.eq.s32.totalorder %v2678, 16
    %v2693 = vmul.f32 %v2685, %v2691
    %v2694 = vsel %vm2692, %v2674, %v2693
    %2695 = vst [vmem:[%s2] sm:$0xff] %v2694
    // Predicated region
    $region14: #{forward.1} parent=1 // pred_check
      _
    $region15: #{forward.1} parent=1 // pred_check_branch
      %2697 = sbr.rel (0) target = $region17
    $region16: #{forward.1} parent=1 // pred_region
      _
    $region17: #{forward.1} parent=1 // pred_fallthru
      _
    // Predicated region
    $region18: #{forward.1} parent=1 // pred_check
      _
    $region19: #{forward.1} parent=1 // pred_check_branch
      %2699 = sbr.rel (0) target = $region21
    $region20: #{forward.1} parent=1 // pred_region
      _
    $region21: #{forward.1} parent=1 // pred_fallthru
      _
    %2700 = vsyncpa [#allocation3], 1

</llo_original>
